<compile_context>
chip_gen: v7x
topology: tpu7x:2x2x1
jax: 0.10.0
libtpu: 0.0.40
codegen_flags: <defaults>
</compile_context>

<pallas_src>
import jax
import jax.numpy as jnp
from jax.experimental import pallas as pl
from jax.experimental.pallas import tpu as pltpu


def _round_up(x, m):
    return ((x + m - 1) // m) * m


# ------------------------------ fused kernel --------------------------------

def _igcn_fused_kernel(ctx_ref, asp_ref,
                       wc1_ref, bc1_ref, wc2_ref, bc2_ref,
                       wa1_ref, ba1_ref, wa2_ref, ba2_ref,
                       wcg_ref, bcg_ref, wag_ref, bag_ref,
                       wdc_ref, wda_ref, bd_ref, out_ref):
    """One batch-block of the whole IGCN pipeline.

    ctx_ref: (BB, Lc+Kmax-1, Dcp) bf16     asp_ref: (BB, La+Kmax-1, Dap) bf16
    w*1/w*2: (Kmax, Cin_pad, Hp)  bf16     b*:      (1, Hp)              f32
    wcg/wag: (Hp, Hp) bf16 (block-diag)    bcg/bag: (1, Hp)              f32
    wdc/wda: (Hp, Pp) bf16                 bd:      (1, Pp)              f32
    out_ref: (BB, Pp) f32
    """
    kmax = wc1_ref.shape[0]
    bb = ctx_ref.shape[0]
    lc = ctx_ref.shape[1] - (kmax - 1)
    la = asp_ref.shape[1] - (kmax - 1)
    hp = wc1_ref.shape[2]

    xc = ctx_ref[...]                       # (bb, Lpc, Dcp) bf16
    xa = asp_ref[...]                       # (bb, Lpa, Dap) bf16

    def conv(x, w_ref, b_ref, l):
        # "same" 1D conv, all kernel sizes stacked along the (padded) Cout axis.
        cin = x.shape[2]
        acc = jnp.zeros((bb * l, hp), jnp.float32)
        for dk in range(kmax):              # static, small Kmax -> unrolled
            xs = x[:, dk:dk + l, :].reshape(bb * l, cin)      # M = bb*l rows
            acc = acc + jnp.dot(xs, w_ref[dk],
                                preferred_element_type=jnp.float32)
        acc = acc + b_ref[...]              # (1, hp) broadcast
        return acc.reshape(bb, l, hp)       # back to per-sample layout

    # conv banks (bank1: tanh operand + pool source, bank2: gate operand)
    a1 = conv(xa, wa1_ref, ba1_ref, la)     # (bb, la, hp) f32
    a2 = conv(xa, wa2_ref, ba2_ref, la)
    c1 = conv(xc, wc1_ref, bc1_ref, lc)     # (bb, lc, hp) f32
    c2 = conv(xc, wc2_ref, bc2_ref, lc)

    # max-pool over length (stays in registers — no HBM round trip)
    a_pool = jnp.max(a1, axis=1)            # (bb, hp)
    c_pool = jnp.max(c1, axis=1)            # (bb, hp)

    # gate-bias linears: block-diagonal weight applies the shared (C, C) FC to
    # every kernel-size block in one matmul per direction.
    gb_ctx = jnp.dot(a_pool.astype(wcg_ref.dtype), wcg_ref[...],
                     preferred_element_type=jnp.float32) + bcg_ref[...]
    gb_asp = jnp.dot(c_pool.astype(wag_ref.dtype), wag_ref[...],
                     preferred_element_type=jnp.float32) + bag_ref[...]

    # GCAE-style gate: tanh(conv1) * relu(conv2 + fc(other_pool))
    gated_c = jnp.tanh(c1) * jnp.maximum(c2 + gb_ctx[:, None, :], 0.0)
    gated_a = jnp.tanh(a1) * jnp.maximum(a2 + gb_asp[:, None, :], 0.0)

    pc = jnp.max(gated_c, axis=1)           # (bb, hp)  pooled context branch
    pa = jnp.max(gated_a, axis=1)           # (bb, hp)  pooled aspect branch

    # final dense, split by branch so no lane-axis concat is needed
    out = (jnp.dot(pc.astype(wdc_ref.dtype), wdc_ref[...],
                   preferred_element_type=jnp.float32)
           + jnp.dot(pa.astype(wda_ref.dtype), wda_ref[...],
                     preferred_element_type=jnp.float32)
           + bd_ref[...])
    out_ref[...] = out                      # lane-dense (bb, Pp) f32 store


def igcn_fused(p, context, aspect):
    """context: (B, L, Dc) f32, aspect: (B, La, Da) f32 -> logits (B, P)."""
    kmax = p["meta"]["kmax"]
    polar = p["meta"]["polarities"]
    pad = (kmax - 1) // 2

    B, L, _ = context.shape
    _, La, _ = aspect.shape
    dcp = p["wc1"].shape[1]
    dap = p["wa1"].shape[1]
    hp = p["wc1"].shape[2]
    pp = p["wdc"].shape[1]

    # batch block: full batch if small, else multiples of 8 (sublane aligned)
    bb = B if B <= 8 else 8
    b_pad = _round_up(B, bb)

    def prep(x, d_pad):
        # bf16 storage + one-time halo pad (hoisted out of the kernel) + channel
        # zero-pad (matching zero weight rows -> numerically identical).
        x = x.astype(jnp.bfloat16)
        return jnp.pad(x, ((0, b_pad - x.shape[0]), (pad, pad),
                           (0, d_pad - x.shape[2])))

    ctx = prep(context, dcp)                # (b_pad, L+2*pad, dcp)
    asp = prep(aspect, dap)                 # (b_pad, La+2*pad, dap)

    lpc = L + 2 * pad
    lpa = La + 2 * pad
    full2 = lambda i: (0, 0)
    full3 = lambda i: (0, 0, 0)

    out = pl.pallas_call(
        _igcn_fused_kernel,
        out_shape=jax.ShapeDtypeStruct((b_pad, pp), jnp.float32),
        grid=(b_pad // bb,),
        in_specs=[
            pl.BlockSpec((bb, lpc, dcp), lambda i: (i, 0, 0)),
            pl.BlockSpec((bb, lpa, dap), lambda i: (i, 0, 0)),
            pl.BlockSpec(p["wc1"].shape, full3), pl.BlockSpec(p["bc1"].shape, full2),
            pl.BlockSpec(p["wc2"].shape, full3), pl.BlockSpec(p["bc2"].shape, full2),
            pl.BlockSpec(p["wa1"].shape, full3), pl.BlockSpec(p["ba1"].shape, full2),
            pl.BlockSpec(p["wa2"].shape, full3), pl.BlockSpec(p["ba2"].shape, full2),
            pl.BlockSpec(p["wcg"].shape, full2), pl.BlockSpec(p["bcg"].shape, full2),
            pl.BlockSpec(p["wag"].shape, full2), pl.BlockSpec(p["bag"].shape, full2),
            pl.BlockSpec(p["wdc"].shape, full2), pl.BlockSpec(p["wda"].shape, full2),
            pl.BlockSpec(p["bd"].shape, full2),
        ],
        out_specs=pl.BlockSpec((bb, pp), lambda i: (i, 0)),
        compiler_params=pltpu.CompilerParams(
            dimension_semantics=("parallel",)),   # shard batch blocks on v7x 2xTC
    )(ctx, asp,
      p["wc1"], p["bc1"], p["wc2"], p["bc2"],
      p["wa1"], p["ba1"], p["wa2"], p["ba2"],
      p["wcg"], p["bcg"], p["wag"], p["bag"],
      p["wdc"], p["wda"], p["bd"])

    return out[:B, :polar]


# ------------------------- parameter setup (glue) ---------------------------

def weight_norm_conv(v, g):
    """PyTorch weight_norm(dim=0) for Conv2d weight v: (Cout, Cin, K, 1), g: (Cout,).
    Returns effective weight reorganized to (K, Cin, Cout) for the NLC kernel.
    (No eps, matching PyTorch's eps-free weight_norm.)"""
    norm = jnp.sqrt(jnp.sum(v * v, axis=(1, 2, 3), keepdims=True))
    w = g.reshape(-1, 1, 1, 1) * v / norm
    return jnp.transpose(w[..., 0], (2, 1, 0))  # (K, Cin, Cout)


def init_params(key, *, vocab, pos_vocab, max_pos, word_dim, pos_dim, position_dim,
                in_channels, kernel_sizes, polarities_dim, dtype=jnp.bfloat16):
    ks = list(kernel_sizes)
    if any(k % 2 == 0 for k in ks):
        # even K breaks the shared "same"-padding stacking (and the original
        # torch.cat over kernel sizes would also require equal output lengths).
        raise ValueError("IGCN Pallas port requires odd kernel sizes")
    nks = len(ks)
    kmax = max(ks)
    C = in_channels
    H = nks * C                              # channels per branch (un-padded)
    hp = _round_up(H, 128)                   # lane-dense padded channel width
    pp = _round_up(polarities_dim, 128)      # lane-dense logits
    d_ctx = word_dim + pos_dim + position_dim
    d_asp = word_dim + pos_dim
    dcp = _round_up(d_ctx, 8)
    dap = _round_up(d_asp, 8)

    keys = iter(jax.random.split(key, 128))
    nrm = lambda shape, s=0.1: s * jax.random.normal(next(keys), shape, jnp.float32)

    def conv_bank(cin, cin_pad):
        # Stack all kernel sizes along Cout; zero-pad K to Kmax (centred) and
        # Cin/Cout to padded sizes (zeros -> numerically identical conv).
        W = jnp.zeros((kmax, cin_pad, hp), jnp.float32)
        bvec = jnp.zeros((hp,), jnp.float32)
        for i, k in enumerate(ks):
            v = nrm((C, cin, k, 1))
            g = 1.0 + 0.1 * jax.random.normal(next(keys), (C,), jnp.float32)
            b = nrm((C,))
            w = weight_norm_conv(v, g)                     # (k, cin, C)
            off = (kmax - k) // 2
            W = W.at[off:off + k, :cin, i * C:(i + 1) * C].set(w)
            bvec = bvec.at[i * C:(i + 1) * C].set(b)
        return W.astype(dtype), bvec.reshape(1, hp)        # weights bf16, bias f32

    def gate_fc():
        # shared (C, C) linear replicated block-diagonally over kernel sizes
        Wg = nrm((C, C))
        bg = nrm((C,))
        W = jnp.zeros((hp, hp), jnp.float32)
        b = jnp.zeros((hp,), jnp.float32)
        for i in range(nks):
            W = W.at[i * C:(i + 1) * C, i * C:(i + 1) * C].set(Wg)
            b = b.at[i * C:(i + 1) * C].set(bg)
        return W.astype(dtype), b.reshape(1, hp)

    wc1, bc1 = conv_bank(d_ctx, dcp)        # cnn_context
    wc2, bc2 = conv_bank(d_ctx, dcp)        # cnn_context2
    wa1, ba1 = conv_bank(d_asp, dap)        # cnn_aspect
    wa2, ba2 = conv_bank(d_asp, dap)        # cnn_aspect2
    wcg, bcg = gate_fc()                    # fc_context_gate
    wag, bag = gate_fc()                    # fc_aspect_gate

    final_dim = 2 * H
    Wd = nrm((final_dim, polarities_dim))
    bd = nrm((polarities_dim,))
    wdc = jnp.zeros((hp, pp), jnp.float32).at[:H, :polarities_dim].set(Wd[:H])
    wda = jnp.zeros((hp, pp), jnp.float32).at[:H, :polarities_dim].set(Wd[H:])
    bdp = jnp.zeros((pp,), jnp.float32).at[:polarities_dim].set(bd)

    return {
        "embed": nrm((vocab, word_dim), 0.5),
        "pos_embed": nrm((pos_vocab, pos_dim), 0.5),
        "position_embed": nrm((max_pos, position_dim), 0.5),
        "wc1": wc1, "bc1": bc1, "wc2": wc2, "bc2": bc2,
        "wa1": wa1, "ba1": ba1, "wa2": wa2, "ba2": ba2,
        "wcg": wcg, "bcg": bcg, "wag": wag, "bag": bag,
        "wdc": wdc.astype(dtype), "wda": wda.astype(dtype),
        "bd": bdp.reshape(1, pp),
        "meta": {"kmax": kmax, "polarities": polarities_dim},
    }


# ------------------------------ forward pass --------------------------------

def igcn_forward(params, inputs):
    text_idx, aspect_idx, pos_idx, aspect_pos_idx, position_idx = inputs

    # embedding lookups + concat (plain-JAX glue — data-dependent gathers)
    context = jnp.take(params["embed"], text_idx, axis=0)             # (B, L,  word)
    aspect = jnp.take(params["embed"], aspect_idx, axis=0)            # (B, La, word)
    position = jnp.take(params["position_embed"], position_idx, 0)    # (B, L,  posn)
    pos_tags = jnp.take(params["pos_embed"], pos_idx, axis=0)         # (B, L,  pos)
    aspect_pos_tags = jnp.take(params["pos_embed"], aspect_pos_idx, 0)

    context = jnp.concatenate([context, pos_tags, position], axis=-1)  # (B, L,  Dc)
    aspect = jnp.concatenate([aspect, aspect_pos_tags], axis=-1)       # (B, La, Da)

    # everything else (convs, gates, pools, dense) in ONE fused Pallas kernel
    # (dropout is identity at inference time)
    return igcn_fused(params, context, aspect)


# ----------------------------------- main ------------------------------------

if __name__ == "__main__":
    # small synthetic config (L / La multiples of 8 keep in-kernel reshapes
    # pure tile regroups)
    B, L, La = 2, 16, 8
    VOCAB, POS_VOCAB, MAX_POS = 50, 10, 120
    WORD_DIM, POS_DIM, POSITION_DIM = 20, 12, 8
    IN_CHANNELS = 16
    KERNEL_SIZES = (3, 5)          # kernel_sizes_context == kernel_sizes_aspect
    POLARITIES = 3

    root = jax.random.PRNGKey(0)
    k_par, k_t, k_a, k_p, k_ap, k_pos = jax.random.split(root, 6)

    params = init_params(
        k_par, vocab=VOCAB, pos_vocab=POS_VOCAB, max_pos=MAX_POS,
        word_dim=WORD_DIM, pos_dim=POS_DIM, position_dim=POSITION_DIM,
        in_channels=IN_CHANNELS, kernel_sizes=KERNEL_SIZES,
        polarities_dim=POLARITIES,
    )

    inputs = (
        jax.random.randint(k_t, (B, L), 0, VOCAB, jnp.int32),        # text_raw_indices
        jax.random.randint(k_a, (B, La), 0, VOCAB, jnp.int32),       # aspect_indices
        jax.random.randint(k_p, (B, L), 0, POS_VOCAB, jnp.int32),    # pos_indices
        jax.random.randint(k_ap, (B, La), 0, POS_VOCAB, jnp.int32),  # aspect_pos_indices
        jax.random.randint(k_pos, (B, L), 0, MAX_POS, jnp.int32),    # position_indices
    )

    out = igcn_forward(params, inputs)
    jax.block_until_ready(out)
    assert out.shape == (B, POLARITIES), out.shape
    assert bool(jnp.all(jnp.isfinite(out)))
    print("KERNEL_OK")
</pallas_src>

<mosaic_0001>
module attributes {stable_mosaic.version = 11 : i64} {
  func.func @_igcn_fused_kernel(%arg0: i32, %arg1: memref<2x20x40xbf16, #tpu.memory_space<vmem>>, %arg2: memref<2x12x32xbf16, #tpu.memory_space<vmem>>, %arg3: memref<5x40x128xbf16, #tpu.memory_space<vmem>>, %arg4: memref<1x128xf32, #tpu.memory_space<vmem>>, %arg5: memref<5x40x128xbf16, #tpu.memory_space<vmem>>, %arg6: memref<1x128xf32, #tpu.memory_space<vmem>>, %arg7: memref<5x32x128xbf16, #tpu.memory_space<vmem>>, %arg8: memref<1x128xf32, #tpu.memory_space<vmem>>, %arg9: memref<5x32x128xbf16, #tpu.memory_space<vmem>>, %arg10: memref<1x128xf32, #tpu.memory_space<vmem>>, %arg11: memref<128x128xbf16, #tpu.memory_space<vmem>>, %arg12: memref<1x128xf32, #tpu.memory_space<vmem>>, %arg13: memref<128x128xbf16, #tpu.memory_space<vmem>>, %arg14: memref<1x128xf32, #tpu.memory_space<vmem>>, %arg15: memref<128x128xbf16, #tpu.memory_space<vmem>>, %arg16: memref<128x128xbf16, #tpu.memory_space<vmem>>, %arg17: memref<1x128xf32, #tpu.memory_space<vmem>>, %arg18: memref<2x128xf32, #tpu.memory_space<vmem>>) attributes {dimension_semantics = [#tpu.dimension_semantics<parallel>], iteration_bounds = array<i64: 1>, scalar_prefetch = 0 : i64, scratch_operands = 0 : i64, tpu.core_type = #tpu.core_type<tc>, window_params = [{transform_indices = @transform_0, window_bounds = array<i64: 2, 20, 40>}, {transform_indices = @transform_1, window_bounds = array<i64: 2, 12, 32>}, {pipeline_mode = #tpu.pipeline_mode<synchronous>, transform_indices = @transform_2, window_bounds = array<i64: 5, 40, 128>}, {pipeline_mode = #tpu.pipeline_mode<synchronous>, transform_indices = @transform_3, window_bounds = array<i64: 1, 128>}, {pipeline_mode = #tpu.pipeline_mode<synchronous>, transform_indices = @transform_4, window_bounds = array<i64: 5, 40, 128>}, {pipeline_mode = #tpu.pipeline_mode<synchronous>, transform_indices = @transform_5, window_bounds = array<i64: 1, 128>}, {pipeline_mode = #tpu.pipeline_mode<synchronous>, transform_indices = @transform_6, window_bounds = array<i64: 5, 32, 128>}, {pipeline_mode = #tpu.pipeline_mode<synchronous>, transform_indices = @transform_7, window_bounds = array<i64: 1, 128>}, {pipeline_mode = #tpu.pipeline_mode<synchronous>, transform_indices = @transform_8, window_bounds = array<i64: 5, 32, 128>}, {pipeline_mode = #tpu.pipeline_mode<synchronous>, transform_indices = @transform_9, window_bounds = array<i64: 1, 128>}, {pipeline_mode = #tpu.pipeline_mode<synchronous>, transform_indices = @transform_10, window_bounds = array<i64: 128, 128>}, {pipeline_mode = #tpu.pipeline_mode<synchronous>, transform_indices = @transform_11, window_bounds = array<i64: 1, 128>}, {pipeline_mode = #tpu.pipeline_mode<synchronous>, transform_indices = @transform_12, window_bounds = array<i64: 128, 128>}, {pipeline_mode = #tpu.pipeline_mode<synchronous>, transform_indices = @transform_13, window_bounds = array<i64: 1, 128>}, {pipeline_mode = #tpu.pipeline_mode<synchronous>, transform_indices = @transform_14, window_bounds = array<i64: 128, 128>}, {pipeline_mode = #tpu.pipeline_mode<synchronous>, transform_indices = @transform_15, window_bounds = array<i64: 128, 128>}, {pipeline_mode = #tpu.pipeline_mode<synchronous>, transform_indices = @transform_16, window_bounds = array<i64: 1, 128>}, {transform_indices = @transform_17, window_bounds = array<i64: 2, 128>}]} {
    %c0 = arith.constant 0 : index
    %c0_0 = arith.constant 0 : index
    %c0_1 = arith.constant 0 : index
    %0 = vector.load %arg1[%c0, %c0_0, %c0_1] : memref<2x20x40xbf16, #tpu.memory_space<vmem>>, vector<2x20x40xbf16>
    %c0_2 = arith.constant 0 : index
    %c0_3 = arith.constant 0 : index
    %c0_4 = arith.constant 0 : index
    %1 = vector.load %arg2[%c0_2, %c0_3, %c0_4] : memref<2x12x32xbf16, #tpu.memory_space<vmem>>, vector<2x12x32xbf16>
    %cst = arith.constant 0.000000e+00 : f32
    %2 = vector.broadcast %cst : f32 to vector<16x128xf32>
    %3 = vector.extract_strided_slice %1 {offsets = [0, 0, 0], sizes = [2, 8, 32], strides = [1, 1, 1]} : vector<2x12x32xbf16> to vector<2x8x32xbf16>
    %4 = vector.shape_cast %3 : vector<2x8x32xbf16> to vector<16x32xbf16>
    %c0_5 = arith.constant 0 : index
    %c0_6 = arith.constant 0 : index
    %c0_7 = arith.constant 0 : index
    %5 = vector.load %arg7[%c0_5, %c0_6, %c0_7] : memref<5x32x128xbf16, #tpu.memory_space<vmem>>, vector<1x32x128xbf16>
    %6 = vector.shape_cast %5 : vector<1x32x128xbf16> to vector<32x128xbf16>
    %cst_8 = arith.constant dense<0.000000e+00> : vector<16x128xf32>
    %7 = tpu.matmul %4, %6, %cst_8 {dimension_numbers = #tpu.dot_dimension_numbers<[1], [0], [0], [1], [0, 0, 1, 1], [], []>} : vector<16x32xbf16>, vector<32x128xbf16>, vector<16x128xf32> -> vector<16x128xf32>
    %8 = arith.addf %2, %7 : vector<16x128xf32>
    %9 = vector.extract_strided_slice %1 {offsets = [0, 1, 0], sizes = [2, 8, 32], strides = [1, 1, 1]} : vector<2x12x32xbf16> to vector<2x8x32xbf16>
    %10 = vector.shape_cast %9 : vector<2x8x32xbf16> to vector<16x32xbf16>
    %c1 = arith.constant 1 : index
    %c0_9 = arith.constant 0 : index
    %c0_10 = arith.constant 0 : index
    %11 = vector.load %arg7[%c1, %c0_9, %c0_10] : memref<5x32x128xbf16, #tpu.memory_space<vmem>>, vector<1x32x128xbf16>
    %12 = vector.shape_cast %11 : vector<1x32x128xbf16> to vector<32x128xbf16>
    %cst_11 = arith.constant dense<0.000000e+00> : vector<16x128xf32>
    %13 = tpu.matmul %10, %12, %cst_11 {dimension_numbers = #tpu.dot_dimension_numbers<[1], [0], [0], [1], [0, 0, 1, 1], [], []>} : vector<16x32xbf16>, vector<32x128xbf16>, vector<16x128xf32> -> vector<16x128xf32>
    %14 = arith.addf %8, %13 : vector<16x128xf32>
    %15 = vector.extract_strided_slice %1 {offsets = [0, 2, 0], sizes = [2, 8, 32], strides = [1, 1, 1]} : vector<2x12x32xbf16> to vector<2x8x32xbf16>
    %16 = vector.shape_cast %15 : vector<2x8x32xbf16> to vector<16x32xbf16>
    %c2 = arith.constant 2 : index
    %c0_12 = arith.constant 0 : index
    %c0_13 = arith.constant 0 : index
    %17 = vector.load %arg7[%c2, %c0_12, %c0_13] : memref<5x32x128xbf16, #tpu.memory_space<vmem>>, vector<1x32x128xbf16>
    %18 = vector.shape_cast %17 : vector<1x32x128xbf16> to vector<32x128xbf16>
    %cst_14 = arith.constant dense<0.000000e+00> : vector<16x128xf32>
    %19 = tpu.matmul %16, %18, %cst_14 {dimension_numbers = #tpu.dot_dimension_numbers<[1], [0], [0], [1], [0, 0, 1, 1], [], []>} : vector<16x32xbf16>, vector<32x128xbf16>, vector<16x128xf32> -> vector<16x128xf32>
    %20 = arith.addf %14, %19 : vector<16x128xf32>
    %21 = vector.extract_strided_slice %1 {offsets = [0, 3, 0], sizes = [2, 8, 32], strides = [1, 1, 1]} : vector<2x12x32xbf16> to vector<2x8x32xbf16>
    %22 = vector.shape_cast %21 : vector<2x8x32xbf16> to vector<16x32xbf16>
    %c3 = arith.constant 3 : index
    %c0_15 = arith.constant 0 : index
    %c0_16 = arith.constant 0 : index
    %23 = vector.load %arg7[%c3, %c0_15, %c0_16] : memref<5x32x128xbf16, #tpu.memory_space<vmem>>, vector<1x32x128xbf16>
    %24 = vector.shape_cast %23 : vector<1x32x128xbf16> to vector<32x128xbf16>
    %cst_17 = arith.constant dense<0.000000e+00> : vector<16x128xf32>
    %25 = tpu.matmul %22, %24, %cst_17 {dimension_numbers = #tpu.dot_dimension_numbers<[1], [0], [0], [1], [0, 0, 1, 1], [], []>} : vector<16x32xbf16>, vector<32x128xbf16>, vector<16x128xf32> -> vector<16x128xf32>
    %26 = arith.addf %20, %25 : vector<16x128xf32>
    %27 = vector.extract_strided_slice %1 {offsets = [0, 4, 0], sizes = [2, 8, 32], strides = [1, 1, 1]} : vector<2x12x32xbf16> to vector<2x8x32xbf16>
    %28 = vector.shape_cast %27 : vector<2x8x32xbf16> to vector<16x32xbf16>
    %c4 = arith.constant 4 : index
    %c0_18 = arith.constant 0 : index
    %c0_19 = arith.constant 0 : index
    %29 = vector.load %arg7[%c4, %c0_18, %c0_19] : memref<5x32x128xbf16, #tpu.memory_space<vmem>>, vector<1x32x128xbf16>
    %30 = vector.shape_cast %29 : vector<1x32x128xbf16> to vector<32x128xbf16>
    %cst_20 = arith.constant dense<0.000000e+00> : vector<16x128xf32>
    %31 = tpu.matmul %28, %30, %cst_20 {dimension_numbers = #tpu.dot_dimension_numbers<[1], [0], [0], [1], [0, 0, 1, 1], [], []>} : vector<16x32xbf16>, vector<32x128xbf16>, vector<16x128xf32> -> vector<16x128xf32>
    %32 = arith.addf %26, %31 : vector<16x128xf32>
    %c0_21 = arith.constant 0 : index
    %c0_22 = arith.constant 0 : index
    %33 = vector.load %arg8[%c0_21, %c0_22] : memref<1x128xf32, #tpu.memory_space<vmem>>, vector<1x128xf32>
    %34 = vector.broadcast %33 : vector<1x128xf32> to vector<16x128xf32>
    %35 = arith.addf %32, %34 : vector<16x128xf32>
    %36 = vector.shape_cast %35 : vector<16x128xf32> to vector<2x8x128xf32>
    %cst_23 = arith.constant 0.000000e+00 : f32
    %37 = vector.broadcast %cst_23 : f32 to vector<16x128xf32>
    %38 = vector.extract_strided_slice %1 {offsets = [0, 0, 0], sizes = [2, 8, 32], strides = [1, 1, 1]} : vector<2x12x32xbf16> to vector<2x8x32xbf16>
    %39 = vector.shape_cast %38 : vector<2x8x32xbf16> to vector<16x32xbf16>
    %c0_24 = arith.constant 0 : index
    %c0_25 = arith.constant 0 : index
    %c0_26 = arith.constant 0 : index
    %40 = vector.load %arg9[%c0_24, %c0_25, %c0_26] : memref<5x32x128xbf16, #tpu.memory_space<vmem>>, vector<1x32x128xbf16>
    %41 = vector.shape_cast %40 : vector<1x32x128xbf16> to vector<32x128xbf16>
    %cst_27 = arith.constant dense<0.000000e+00> : vector<16x128xf32>
    %42 = tpu.matmul %39, %41, %cst_27 {dimension_numbers = #tpu.dot_dimension_numbers<[1], [0], [0], [1], [0, 0, 1, 1], [], []>} : vector<16x32xbf16>, vector<32x128xbf16>, vector<16x128xf32> -> vector<16x128xf32>
    %43 = arith.addf %37, %42 : vector<16x128xf32>
    %44 = vector.extract_strided_slice %1 {offsets = [0, 1, 0], sizes = [2, 8, 32], strides = [1, 1, 1]} : vector<2x12x32xbf16> to vector<2x8x32xbf16>
    %45 = vector.shape_cast %44 : vector<2x8x32xbf16> to vector<16x32xbf16>
    %c1_28 = arith.constant 1 : index
    %c0_29 = arith.constant 0 : index
    %c0_30 = arith.constant 0 : index
    %46 = vector.load %arg9[%c1_28, %c0_29, %c0_30] : memref<5x32x128xbf16, #tpu.memory_space<vmem>>, vector<1x32x128xbf16>
    %47 = vector.shape_cast %46 : vector<1x32x128xbf16> to vector<32x128xbf16>
    %cst_31 = arith.constant dense<0.000000e+00> : vector<16x128xf32>
    %48 = tpu.matmul %45, %47, %cst_31 {dimension_numbers = #tpu.dot_dimension_numbers<[1], [0], [0], [1], [0, 0, 1, 1], [], []>} : vector<16x32xbf16>, vector<32x128xbf16>, vector<16x128xf32> -> vector<16x128xf32>
    %49 = arith.addf %43, %48 : vector<16x128xf32>
    %50 = vector.extract_strided_slice %1 {offsets = [0, 2, 0], sizes = [2, 8, 32], strides = [1, 1, 1]} : vector<2x12x32xbf16> to vector<2x8x32xbf16>
    %51 = vector.shape_cast %50 : vector<2x8x32xbf16> to vector<16x32xbf16>
    %c2_32 = arith.constant 2 : index
    %c0_33 = arith.constant 0 : index
    %c0_34 = arith.constant 0 : index
    %52 = vector.load %arg9[%c2_32, %c0_33, %c0_34] : memref<5x32x128xbf16, #tpu.memory_space<vmem>>, vector<1x32x128xbf16>
    %53 = vector.shape_cast %52 : vector<1x32x128xbf16> to vector<32x128xbf16>
    %cst_35 = arith.constant dense<0.000000e+00> : vector<16x128xf32>
    %54 = tpu.matmul %51, %53, %cst_35 {dimension_numbers = #tpu.dot_dimension_numbers<[1], [0], [0], [1], [0, 0, 1, 1], [], []>} : vector<16x32xbf16>, vector<32x128xbf16>, vector<16x128xf32> -> vector<16x128xf32>
    %55 = arith.addf %49, %54 : vector<16x128xf32>
    %56 = vector.extract_strided_slice %1 {offsets = [0, 3, 0], sizes = [2, 8, 32], strides = [1, 1, 1]} : vector<2x12x32xbf16> to vector<2x8x32xbf16>
    %57 = vector.shape_cast %56 : vector<2x8x32xbf16> to vector<16x32xbf16>
    %c3_36 = arith.constant 3 : index
    %c0_37 = arith.constant 0 : index
    %c0_38 = arith.constant 0 : index
    %58 = vector.load %arg9[%c3_36, %c0_37, %c0_38] : memref<5x32x128xbf16, #tpu.memory_space<vmem>>, vector<1x32x128xbf16>
    %59 = vector.shape_cast %58 : vector<1x32x128xbf16> to vector<32x128xbf16>
    %cst_39 = arith.constant dense<0.000000e+00> : vector<16x128xf32>
    %60 = tpu.matmul %57, %59, %cst_39 {dimension_numbers = #tpu.dot_dimension_numbers<[1], [0], [0], [1], [0, 0, 1, 1], [], []>} : vector<16x32xbf16>, vector<32x128xbf16>, vector<16x128xf32> -> vector<16x128xf32>
    %61 = arith.addf %55, %60 : vector<16x128xf32>
    %62 = vector.extract_strided_slice %1 {offsets = [0, 4, 0], sizes = [2, 8, 32], strides = [1, 1, 1]} : vector<2x12x32xbf16> to vector<2x8x32xbf16>
    %63 = vector.shape_cast %62 : vector<2x8x32xbf16> to vector<16x32xbf16>
    %c4_40 = arith.constant 4 : index
    %c0_41 = arith.constant 0 : index
    %c0_42 = arith.constant 0 : index
    %64 = vector.load %arg9[%c4_40, %c0_41, %c0_42] : memref<5x32x128xbf16, #tpu.memory_space<vmem>>, vector<1x32x128xbf16>
    %65 = vector.shape_cast %64 : vector<1x32x128xbf16> to vector<32x128xbf16>
    %cst_43 = arith.constant dense<0.000000e+00> : vector<16x128xf32>
    %66 = tpu.matmul %63, %65, %cst_43 {dimension_numbers = #tpu.dot_dimension_numbers<[1], [0], [0], [1], [0, 0, 1, 1], [], []>} : vector<16x32xbf16>, vector<32x128xbf16>, vector<16x128xf32> -> vector<16x128xf32>
    %67 = arith.addf %61, %66 : vector<16x128xf32>
    %c0_44 = arith.constant 0 : index
    %c0_45 = arith.constant 0 : index
    %68 = vector.load %arg10[%c0_44, %c0_45] : memref<1x128xf32, #tpu.memory_space<vmem>>, vector<1x128xf32>
    %69 = vector.broadcast %68 : vector<1x128xf32> to vector<16x128xf32>
    %70 = arith.addf %67, %69 : vector<16x128xf32>
    %71 = vector.shape_cast %70 : vector<16x128xf32> to vector<2x8x128xf32>
    %cst_46 = arith.constant 0.000000e+00 : f32
    %72 = vector.broadcast %cst_46 : f32 to vector<32x128xf32>
    %73 = vector.extract_strided_slice %0 {offsets = [0, 0, 0], sizes = [2, 16, 40], strides = [1, 1, 1]} : vector<2x20x40xbf16> to vector<2x16x40xbf16>
    %74 = vector.shape_cast %73 : vector<2x16x40xbf16> to vector<32x40xbf16>
    %c0_47 = arith.constant 0 : index
    %c0_48 = arith.constant 0 : index
    %c0_49 = arith.constant 0 : index
    %75 = vector.load %arg3[%c0_47, %c0_48, %c0_49] : memref<5x40x128xbf16, #tpu.memory_space<vmem>>, vector<1x40x128xbf16>
    %76 = vector.shape_cast %75 : vector<1x40x128xbf16> to vector<40x128xbf16>
    %cst_50 = arith.constant dense<0.000000e+00> : vector<32x128xf32>
    %77 = tpu.matmul %74, %76, %cst_50 {dimension_numbers = #tpu.dot_dimension_numbers<[1], [0], [0], [1], [0, 0, 1, 1], [], []>} : vector<32x40xbf16>, vector<40x128xbf16>, vector<32x128xf32> -> vector<32x128xf32>
    %78 = arith.addf %72, %77 : vector<32x128xf32>
    %79 = vector.extract_strided_slice %0 {offsets = [0, 1, 0], sizes = [2, 16, 40], strides = [1, 1, 1]} : vector<2x20x40xbf16> to vector<2x16x40xbf16>
    %80 = vector.shape_cast %79 : vector<2x16x40xbf16> to vector<32x40xbf16>
    %c1_51 = arith.constant 1 : index
    %c0_52 = arith.constant 0 : index
    %c0_53 = arith.constant 0 : index
    %81 = vector.load %arg3[%c1_51, %c0_52, %c0_53] : memref<5x40x128xbf16, #tpu.memory_space<vmem>>, vector<1x40x128xbf16>
    %82 = vector.shape_cast %81 : vector<1x40x128xbf16> to vector<40x128xbf16>
    %cst_54 = arith.constant dense<0.000000e+00> : vector<32x128xf32>
    %83 = tpu.matmul %80, %82, %cst_54 {dimension_numbers = #tpu.dot_dimension_numbers<[1], [0], [0], [1], [0, 0, 1, 1], [], []>} : vector<32x40xbf16>, vector<40x128xbf16>, vector<32x128xf32> -> vector<32x128xf32>
    %84 = arith.addf %78, %83 : vector<32x128xf32>
    %85 = vector.extract_strided_slice %0 {offsets = [0, 2, 0], sizes = [2, 16, 40], strides = [1, 1, 1]} : vector<2x20x40xbf16> to vector<2x16x40xbf16>
    %86 = vector.shape_cast %85 : vector<2x16x40xbf16> to vector<32x40xbf16>
    %c2_55 = arith.constant 2 : index
    %c0_56 = arith.constant 0 : index
    %c0_57 = arith.constant 0 : index
    %87 = vector.load %arg3[%c2_55, %c0_56, %c0_57] : memref<5x40x128xbf16, #tpu.memory_space<vmem>>, vector<1x40x128xbf16>
    %88 = vector.shape_cast %87 : vector<1x40x128xbf16> to vector<40x128xbf16>
    %cst_58 = arith.constant dense<0.000000e+00> : vector<32x128xf32>
    %89 = tpu.matmul %86, %88, %cst_58 {dimension_numbers = #tpu.dot_dimension_numbers<[1], [0], [0], [1], [0, 0, 1, 1], [], []>} : vector<32x40xbf16>, vector<40x128xbf16>, vector<32x128xf32> -> vector<32x128xf32>
    %90 = arith.addf %84, %89 : vector<32x128xf32>
    %91 = vector.extract_strided_slice %0 {offsets = [0, 3, 0], sizes = [2, 16, 40], strides = [1, 1, 1]} : vector<2x20x40xbf16> to vector<2x16x40xbf16>
    %92 = vector.shape_cast %91 : vector<2x16x40xbf16> to vector<32x40xbf16>
    %c3_59 = arith.constant 3 : index
    %c0_60 = arith.constant 0 : index
    %c0_61 = arith.constant 0 : index
    %93 = vector.load %arg3[%c3_59, %c0_60, %c0_61] : memref<5x40x128xbf16, #tpu.memory_space<vmem>>, vector<1x40x128xbf16>
    %94 = vector.shape_cast %93 : vector<1x40x128xbf16> to vector<40x128xbf16>
    %cst_62 = arith.constant dense<0.000000e+00> : vector<32x128xf32>
    %95 = tpu.matmul %92, %94, %cst_62 {dimension_numbers = #tpu.dot_dimension_numbers<[1], [0], [0], [1], [0, 0, 1, 1], [], []>} : vector<32x40xbf16>, vector<40x128xbf16>, vector<32x128xf32> -> vector<32x128xf32>
    %96 = arith.addf %90, %95 : vector<32x128xf32>
    %97 = vector.extract_strided_slice %0 {offsets = [0, 4, 0], sizes = [2, 16, 40], strides = [1, 1, 1]} : vector<2x20x40xbf16> to vector<2x16x40xbf16>
    %98 = vector.shape_cast %97 : vector<2x16x40xbf16> to vector<32x40xbf16>
    %c4_63 = arith.constant 4 : index
    %c0_64 = arith.constant 0 : index
    %c0_65 = arith.constant 0 : index
    %99 = vector.load %arg3[%c4_63, %c0_64, %c0_65] : memref<5x40x128xbf16, #tpu.memory_space<vmem>>, vector<1x40x128xbf16>
    %100 = vector.shape_cast %99 : vector<1x40x128xbf16> to vector<40x128xbf16>
    %cst_66 = arith.constant dense<0.000000e+00> : vector<32x128xf32>
    %101 = tpu.matmul %98, %100, %cst_66 {dimension_numbers = #tpu.dot_dimension_numbers<[1], [0], [0], [1], [0, 0, 1, 1], [], []>} : vector<32x40xbf16>, vector<40x128xbf16>, vector<32x128xf32> -> vector<32x128xf32>
    %102 = arith.addf %96, %101 : vector<32x128xf32>
    %c0_67 = arith.constant 0 : index
    %c0_68 = arith.constant 0 : index
    %103 = vector.load %arg4[%c0_67, %c0_68] : memref<1x128xf32, #tpu.memory_space<vmem>>, vector<1x128xf32>
    %104 = vector.broadcast %103 : vector<1x128xf32> to vector<32x128xf32>
    %105 = arith.addf %102, %104 : vector<32x128xf32>
    %106 = vector.shape_cast %105 : vector<32x128xf32> to vector<2x16x128xf32>
    %cst_69 = arith.constant 0.000000e+00 : f32
    %107 = vector.broadcast %cst_69 : f32 to vector<32x128xf32>
    %108 = vector.extract_strided_slice %0 {offsets = [0, 0, 0], sizes = [2, 16, 40], strides = [1, 1, 1]} : vector<2x20x40xbf16> to vector<2x16x40xbf16>
    %109 = vector.shape_cast %108 : vector<2x16x40xbf16> to vector<32x40xbf16>
    %c0_70 = arith.constant 0 : index
    %c0_71 = arith.constant 0 : index
    %c0_72 = arith.constant 0 : index
    %110 = vector.load %arg5[%c0_70, %c0_71, %c0_72] : memref<5x40x128xbf16, #tpu.memory_space<vmem>>, vector<1x40x128xbf16>
    %111 = vector.shape_cast %110 : vector<1x40x128xbf16> to vector<40x128xbf16>
    %cst_73 = arith.constant dense<0.000000e+00> : vector<32x128xf32>
    %112 = tpu.matmul %109, %111, %cst_73 {dimension_numbers = #tpu.dot_dimension_numbers<[1], [0], [0], [1], [0, 0, 1, 1], [], []>} : vector<32x40xbf16>, vector<40x128xbf16>, vector<32x128xf32> -> vector<32x128xf32>
    %113 = arith.addf %107, %112 : vector<32x128xf32>
    %114 = vector.extract_strided_slice %0 {offsets = [0, 1, 0], sizes = [2, 16, 40], strides = [1, 1, 1]} : vector<2x20x40xbf16> to vector<2x16x40xbf16>
    %115 = vector.shape_cast %114 : vector<2x16x40xbf16> to vector<32x40xbf16>
    %c1_74 = arith.constant 1 : index
    %c0_75 = arith.constant 0 : index
    %c0_76 = arith.constant 0 : index
    %116 = vector.load %arg5[%c1_74, %c0_75, %c0_76] : memref<5x40x128xbf16, #tpu.memory_space<vmem>>, vector<1x40x128xbf16>
    %117 = vector.shape_cast %116 : vector<1x40x128xbf16> to vector<40x128xbf16>
    %cst_77 = arith.constant dense<0.000000e+00> : vector<32x128xf32>
    %118 = tpu.matmul %115, %117, %cst_77 {dimension_numbers = #tpu.dot_dimension_numbers<[1], [0], [0], [1], [0, 0, 1, 1], [], []>} : vector<32x40xbf16>, vector<40x128xbf16>, vector<32x128xf32> -> vector<32x128xf32>
    %119 = arith.addf %113, %118 : vector<32x128xf32>
    %120 = vector.extract_strided_slice %0 {offsets = [0, 2, 0], sizes = [2, 16, 40], strides = [1, 1, 1]} : vector<2x20x40xbf16> to vector<2x16x40xbf16>
    %121 = vector.shape_cast %120 : vector<2x16x40xbf16> to vector<32x40xbf16>
    %c2_78 = arith.constant 2 : index
    %c0_79 = arith.constant 0 : index
    %c0_80 = arith.constant 0 : index
    %122 = vector.load %arg5[%c2_78, %c0_79, %c0_80] : memref<5x40x128xbf16, #tpu.memory_space<vmem>>, vector<1x40x128xbf16>
    %123 = vector.shape_cast %122 : vector<1x40x128xbf16> to vector<40x128xbf16>
    %cst_81 = arith.constant dense<0.000000e+00> : vector<32x128xf32>
    %124 = tpu.matmul %121, %123, %cst_81 {dimension_numbers = #tpu.dot_dimension_numbers<[1], [0], [0], [1], [0, 0, 1, 1], [], []>} : vector<32x40xbf16>, vector<40x128xbf16>, vector<32x128xf32> -> vector<32x128xf32>
    %125 = arith.addf %119, %124 : vector<32x128xf32>
    %126 = vector.extract_strided_slice %0 {offsets = [0, 3, 0], sizes = [2, 16, 40], strides = [1, 1, 1]} : vector<2x20x40xbf16> to vector<2x16x40xbf16>
    %127 = vector.shape_cast %126 : vector<2x16x40xbf16> to vector<32x40xbf16>
    %c3_82 = arith.constant 3 : index
    %c0_83 = arith.constant 0 : index
    %c0_84 = arith.constant 0 : index
    %128 = vector.load %arg5[%c3_82, %c0_83, %c0_84] : memref<5x40x128xbf16, #tpu.memory_space<vmem>>, vector<1x40x128xbf16>
    %129 = vector.shape_cast %128 : vector<1x40x128xbf16> to vector<40x128xbf16>
    %cst_85 = arith.constant dense<0.000000e+00> : vector<32x128xf32>
    %130 = tpu.matmul %127, %129, %cst_85 {dimension_numbers = #tpu.dot_dimension_numbers<[1], [0], [0], [1], [0, 0, 1, 1], [], []>} : vector<32x40xbf16>, vector<40x128xbf16>, vector<32x128xf32> -> vector<32x128xf32>
    %131 = arith.addf %125, %130 : vector<32x128xf32>
    %132 = vector.extract_strided_slice %0 {offsets = [0, 4, 0], sizes = [2, 16, 40], strides = [1, 1, 1]} : vector<2x20x40xbf16> to vector<2x16x40xbf16>
    %133 = vector.shape_cast %132 : vector<2x16x40xbf16> to vector<32x40xbf16>
    %c4_86 = arith.constant 4 : index
    %c0_87 = arith.constant 0 : index
    %c0_88 = arith.constant 0 : index
    %134 = vector.load %arg5[%c4_86, %c0_87, %c0_88] : memref<5x40x128xbf16, #tpu.memory_space<vmem>>, vector<1x40x128xbf16>
    %135 = vector.shape_cast %134 : vector<1x40x128xbf16> to vector<40x128xbf16>
    %cst_89 = arith.constant dense<0.000000e+00> : vector<32x128xf32>
    %136 = tpu.matmul %133, %135, %cst_89 {dimension_numbers = #tpu.dot_dimension_numbers<[1], [0], [0], [1], [0, 0, 1, 1], [], []>} : vector<32x40xbf16>, vector<40x128xbf16>, vector<32x128xf32> -> vector<32x128xf32>
    %137 = arith.addf %131, %136 : vector<32x128xf32>
    %c0_90 = arith.constant 0 : index
    %c0_91 = arith.constant 0 : index
    %138 = vector.load %arg6[%c0_90, %c0_91] : memref<1x128xf32, #tpu.memory_space<vmem>>, vector<1x128xf32>
    %139 = vector.broadcast %138 : vector<1x128xf32> to vector<32x128xf32>
    %140 = arith.addf %137, %139 : vector<32x128xf32>
    %141 = vector.shape_cast %140 : vector<32x128xf32> to vector<2x16x128xf32>
    %cst_92 = arith.constant dense<0xFF800000> : vector<2x128xf32>
    %142 = vector.multi_reduction <maximumf>, %36, %cst_92 [1] : vector<2x8x128xf32> to vector<2x128xf32>
    %cst_93 = arith.constant dense<0xFF800000> : vector<2x128xf32>
    %143 = vector.multi_reduction <maximumf>, %106, %cst_93 [1] : vector<2x16x128xf32> to vector<2x128xf32>
    %144 = arith.truncf %142 : vector<2x128xf32> to vector<2x128xbf16>
    %c0_94 = arith.constant 0 : index
    %c0_95 = arith.constant 0 : index
    %145 = vector.load %arg11[%c0_94, %c0_95] : memref<128x128xbf16, #tpu.memory_space<vmem>>, vector<128x128xbf16>
    %cst_96 = arith.constant dense<0.000000e+00> : vector<2x128xf32>
    %146 = tpu.matmul %144, %145, %cst_96 {dimension_numbers = #tpu.dot_dimension_numbers<[1], [0], [0], [1], [0, 0, 1, 1], [], []>} : vector<2x128xbf16>, vector<128x128xbf16>, vector<2x128xf32> -> vector<2x128xf32>
    %c0_97 = arith.constant 0 : index
    %c0_98 = arith.constant 0 : index
    %147 = vector.load %arg12[%c0_97, %c0_98] : memref<1x128xf32, #tpu.memory_space<vmem>>, vector<1x128xf32>
    %148 = vector.broadcast %147 : vector<1x128xf32> to vector<2x128xf32>
    %149 = arith.addf %146, %148 : vector<2x128xf32>
    %150 = arith.truncf %143 : vector<2x128xf32> to vector<2x128xbf16>
    %c0_99 = arith.constant 0 : index
    %c0_100 = arith.constant 0 : index
    %151 = vector.load %arg13[%c0_99, %c0_100] : memref<128x128xbf16, #tpu.memory_space<vmem>>, vector<128x128xbf16>
    %cst_101 = arith.constant dense<0.000000e+00> : vector<2x128xf32>
    %152 = tpu.matmul %150, %151, %cst_101 {dimension_numbers = #tpu.dot_dimension_numbers<[1], [0], [0], [1], [0, 0, 1, 1], [], []>} : vector<2x128xbf16>, vector<128x128xbf16>, vector<2x128xf32> -> vector<2x128xf32>
    %c0_102 = arith.constant 0 : index
    %c0_103 = arith.constant 0 : index
    %153 = vector.load %arg14[%c0_102, %c0_103] : memref<1x128xf32, #tpu.memory_space<vmem>>, vector<1x128xf32>
    %154 = vector.broadcast %153 : vector<1x128xf32> to vector<2x128xf32>
    %155 = arith.addf %152, %154 : vector<2x128xf32>
    %156 = math.tanh %106 : vector<2x16x128xf32>
    %157 = vector.shape_cast %149 : vector<2x128xf32> to vector<2x1x128xf32>
    %158 = vector.broadcast %157 : vector<2x1x128xf32> to vector<2x16x128xf32>
    %159 = arith.addf %141, %158 : vector<2x16x128xf32>
    %cst_104 = arith.constant 0.000000e+00 : f32
    %160 = vector.broadcast %cst_104 : f32 to vector<2x16x128xf32>
    %161 = arith.maximumf %159, %160 : vector<2x16x128xf32>
    %162 = arith.mulf %156, %161 : vector<2x16x128xf32>
    %163 = math.tanh %36 : vector<2x8x128xf32>
    %164 = vector.shape_cast %155 : vector<2x128xf32> to vector<2x1x128xf32>
    %165 = vector.broadcast %164 : vector<2x1x128xf32> to vector<2x8x128xf32>
    %166 = arith.addf %71, %165 : vector<2x8x128xf32>
    %cst_105 = arith.constant 0.000000e+00 : f32
    %167 = vector.broadcast %cst_105 : f32 to vector<2x8x128xf32>
    %168 = arith.maximumf %166, %167 : vector<2x8x128xf32>
    %169 = arith.mulf %163, %168 : vector<2x8x128xf32>
    %cst_106 = arith.constant dense<0xFF800000> : vector<2x128xf32>
    %170 = vector.multi_reduction <maximumf>, %162, %cst_106 [1] : vector<2x16x128xf32> to vector<2x128xf32>
    %cst_107 = arith.constant dense<0xFF800000> : vector<2x128xf32>
    %171 = vector.multi_reduction <maximumf>, %169, %cst_107 [1] : vector<2x8x128xf32> to vector<2x128xf32>
    %172 = arith.truncf %170 : vector<2x128xf32> to vector<2x128xbf16>
    %c0_108 = arith.constant 0 : index
    %c0_109 = arith.constant 0 : index
    %173 = vector.load %arg15[%c0_108, %c0_109] : memref<128x128xbf16, #tpu.memory_space<vmem>>, vector<128x128xbf16>
    %cst_110 = arith.constant dense<0.000000e+00> : vector<2x128xf32>
    %174 = tpu.matmul %172, %173, %cst_110 {dimension_numbers = #tpu.dot_dimension_numbers<[1], [0], [0], [1], [0, 0, 1, 1], [], []>} : vector<2x128xbf16>, vector<128x128xbf16>, vector<2x128xf32> -> vector<2x128xf32>
    %175 = arith.truncf %171 : vector<2x128xf32> to vector<2x128xbf16>
    %c0_111 = arith.constant 0 : index
    %c0_112 = arith.constant 0 : index
    %176 = vector.load %arg16[%c0_111, %c0_112] : memref<128x128xbf16, #tpu.memory_space<vmem>>, vector<128x128xbf16>
    %cst_113 = arith.constant dense<0.000000e+00> : vector<2x128xf32>
    %177 = tpu.matmul %175, %176, %cst_113 {dimension_numbers = #tpu.dot_dimension_numbers<[1], [0], [0], [1], [0, 0, 1, 1], [], []>} : vector<2x128xbf16>, vector<128x128xbf16>, vector<2x128xf32> -> vector<2x128xf32>
    %178 = arith.addf %174, %177 : vector<2x128xf32>
    %c0_114 = arith.constant 0 : index
    %c0_115 = arith.constant 0 : index
    %179 = vector.load %arg17[%c0_114, %c0_115] : memref<1x128xf32, #tpu.memory_space<vmem>>, vector<1x128xf32>
    %180 = vector.broadcast %179 : vector<1x128xf32> to vector<2x128xf32>
    %181 = arith.addf %178, %180 : vector<2x128xf32>
    %c0_116 = arith.constant 0 : index
    %c0_117 = arith.constant 0 : index
    %182 = vector.load %arg18[%c0_116, %c0_117] : memref<2x128xf32, #tpu.memory_space<vmem>>, vector<2x128xf32>
    tpu.vector_store %arg18[%c0_116, %c0_117], %181 {strides = array<i32>} : memref<2x128xf32, #tpu.memory_space<vmem>>, vector<2x128xf32>,
    return
  }
  func.func @transform_0(%arg0: i32) -> (i32, i32, i32) {
    %c0_i32 = arith.constant 0 : i32
    %c0_i32_0 = arith.constant 0 : i32
    %c0_i32_1 = arith.constant 0 : i32
    return %arg0, %c0_i32, %c0_i32_0 : i32, i32, i32
  }
  func.func @transform_1(%arg0: i32) -> (i32, i32, i32) {
    %c0_i32 = arith.constant 0 : i32
    %c0_i32_0 = arith.constant 0 : i32
    %c0_i32_1 = arith.constant 0 : i32
    return %arg0, %c0_i32, %c0_i32_0 : i32, i32, i32
  }
  func.func @transform_2(%arg0: i32) -> (i32, i32, i32) {
    %c0_i32 = arith.constant 0 : i32
    %c0_i32_0 = arith.constant 0 : i32
    %c0_i32_1 = arith.constant 0 : i32
    %c0_i32_2 = arith.constant 0 : i32
    return %c0_i32, %c0_i32_0, %c0_i32_1 : i32, i32, i32
  }
  func.func @transform_3(%arg0: i32) -> (i32, i32) {
    %c0_i32 = arith.constant 0 : i32
    %c0_i32_0 = arith.constant 0 : i32
    %c0_i32_1 = arith.constant 0 : i32
    return %c0_i32, %c0_i32_0 : i32, i32
  }
  func.func @transform_4(%arg0: i32) -> (i32, i32, i32) {
    %c0_i32 = arith.constant 0 : i32
    %c0_i32_0 = arith.constant 0 : i32
    %c0_i32_1 = arith.constant 0 : i32
    %c0_i32_2 = arith.constant 0 : i32
    return %c0_i32, %c0_i32_0, %c0_i32_1 : i32, i32, i32
  }
  func.func @transform_5(%arg0: i32) -> (i32, i32) {
    %c0_i32 = arith.constant 0 : i32
    %c0_i32_0 = arith.constant 0 : i32
    %c0_i32_1 = arith.constant 0 : i32
    return %c0_i32, %c0_i32_0 : i32, i32
  }
  func.func @transform_6(%arg0: i32) -> (i32, i32, i32) {
    %c0_i32 = arith.constant 0 : i32
    %c0_i32_0 = arith.constant 0 : i32
    %c0_i32_1 = arith.constant 0 : i32
    %c0_i32_2 = arith.constant 0 : i32
    return %c0_i32, %c0_i32_0, %c0_i32_1 : i32, i32, i32
  }
  func.func @transform_7(%arg0: i32) -> (i32, i32) {
    %c0_i32 = arith.constant 0 : i32
    %c0_i32_0 = arith.constant 0 : i32
    %c0_i32_1 = arith.constant 0 : i32
    return %c0_i32, %c0_i32_0 : i32, i32
  }
  func.func @transform_8(%arg0: i32) -> (i32, i32, i32) {
    %c0_i32 = arith.constant 0 : i32
    %c0_i32_0 = arith.constant 0 : i32
    %c0_i32_1 = arith.constant 0 : i32
    %c0_i32_2 = arith.constant 0 : i32
    return %c0_i32, %c0_i32_0, %c0_i32_1 : i32, i32, i32
  }
  func.func @transform_9(%arg0: i32) -> (i32, i32) {
    %c0_i32 = arith.constant 0 : i32
    %c0_i32_0 = arith.constant 0 : i32
    %c0_i32_1 = arith.constant 0 : i32
    return %c0_i32, %c0_i32_0 : i32, i32
  }
  func.func @transform_10(%arg0: i32) -> (i32, i32) {
    %c0_i32 = arith.constant 0 : i32
    %c0_i32_0 = arith.constant 0 : i32
    %c0_i32_1 = arith.constant 0 : i32
    return %c0_i32, %c0_i32_0 : i32, i32
  }
  func.func @transform_11(%arg0: i32) -> (i32, i32) {
    %c0_i32 = arith.constant 0 : i32
    %c0_i32_0 = arith.constant 0 : i32
    %c0_i32_1 = arith.constant 0 : i32
    return %c0_i32, %c0_i32_0 : i32, i32
  }
  func.func @transform_12(%arg0: i32) -> (i32, i32) {
    %c0_i32 = arith.constant 0 : i32
    %c0_i32_0 = arith.constant 0 : i32
    %c0_i32_1 = arith.constant 0 : i32
    return %c0_i32, %c0_i32_0 : i32, i32
  }
  func.func @transform_13(%arg0: i32) -> (i32, i32) {
    %c0_i32 = arith.constant 0 : i32
    %c0_i32_0 = arith.constant 0 : i32
    %c0_i32_1 = arith.constant 0 : i32
    return %c0_i32, %c0_i32_0 : i32, i32
  }
  func.func @transform_14(%arg0: i32) -> (i32, i32) {
    %c0_i32 = arith.constant 0 : i32
    %c0_i32_0 = arith.constant 0 : i32
    %c0_i32_1 = arith.constant 0 : i32
    return %c0_i32, %c0_i32_0 : i32, i32
  }
  func.func @transform_15(%arg0: i32) -> (i32, i32) {
    %c0_i32 = arith.constant 0 : i32
    %c0_i32_0 = arith.constant 0 : i32
    %c0_i32_1 = arith.constant 0 : i32
    return %c0_i32, %c0_i32_0 : i32, i32
  }
  func.func @transform_16(%arg0: i32) -> (i32, i32) {
    %c0_i32 = arith.constant 0 : i32
    %c0_i32_0 = arith.constant 0 : i32
    %c0_i32_1 = arith.constant 0 : i32
    return %c0_i32, %c0_i32_0 : i32, i32
  }
  func.func @transform_17(%arg0: i32) -> (i32, i32) {
    %c0_i32 = arith.constant 0 : i32
    %c0_i32_0 = arith.constant 0 : i32
    return %arg0, %c0_i32 : i32, i32
  }
}

</mosaic_0001>

<llo_original>
// kernel: tpu_custom_call.1
$region0: #{tpu_custom_call.1}
  #allocation0 [shape = 'u32[]', space=smem, size = 0x4, offset = 0x4, fixed_abs, tag = 'smem constant byte address 0x4 - core index']
  #allocation1 [shape = 'u32[144,128]{1,0:T(1,128)}', space=vmem, size = 0x12000, scoped, tag = 'internal scratch']
  %s0 = inlined_call_operand.vmem [shape: bf16[2,20,40], index: 0, kind: input, shape index: {}]
  %s1 = inlined_call_operand.vmem [shape: bf16[2,12,32], index: 1, kind: input, shape index: {}]
  %s2 = inlined_call_operand.hbm [shape: bf16[5,40,128], index: 2, kind: input, shape index: {}]
  %s3 = inlined_call_operand.vmem [shape: f32[1,128], index: 3, kind: input, shape index: {}]
  %s4 = inlined_call_operand.hbm [shape: bf16[5,40,128], index: 4, kind: input, shape index: {}]
  %s5 = inlined_call_operand.vmem [shape: f32[1,128], index: 5, kind: input, shape index: {}]
  %s6 = inlined_call_operand.vmem [shape: bf16[5,32,128], index: 6, kind: input, shape index: {}]
  %s7 = inlined_call_operand.vmem [shape: f32[1,128], index: 7, kind: input, shape index: {}]
  %s8 = inlined_call_operand.hbm [shape: bf16[5,32,128], index: 8, kind: input, shape index: {}]
  %s9 = inlined_call_operand.vmem [shape: f32[1,128], index: 9, kind: input, shape index: {}]
  %s10 = inlined_call_operand.hbm [shape: bf16[128,128], index: 10, kind: input, shape index: {}]
  %s11 = inlined_call_operand.vmem [shape: f32[1,128], index: 11, kind: input, shape index: {}]
  %s12 = inlined_call_operand.hbm [shape: bf16[128,128], index: 12, kind: input, shape index: {}]
  %s13 = inlined_call_operand.vmem [shape: f32[1,128], index: 13, kind: input, shape index: {}]
  %s14 = inlined_call_operand.hbm [shape: bf16[128,128], index: 14, kind: input, shape index: {}]
  %s15 = inlined_call_operand.hbm [shape: bf16[128,128], index: 15, kind: input, shape index: {}]
  %s16 = inlined_call_operand.vmem [shape: f32[1,128], index: 16, kind: input, shape index: {}]
  %s17 = inlined_call_operand.hbm [shape: f32[2,128], index: 17, kind: output, shape index: {}]
  %s18 = sld [smem:[#allocation0]]
  $region106: #{tpu_custom_call.1} parent=0
    _
  %s20 = ssub.s32 1, %s18
  %s21 = scalar_select 0, %s20, %s18
  $region1: #{tpu_custom_call.1} parent=0
    #allocation2 [shape = 'u8[51200]{0}', space=vmem, size = 0xc800, scoped, tag = 'input window, operand 2, single buffered']
    #allocation3 [shape = 's32[1]{0}', space=sflag, size = 0x4, scoped, tag = 'scoped memory for tpu_custom_call.1']
    #allocation4 [shape = 's32[1]{0}', space=sflag, size = 0x4, scoped, tag = 'scoped memory for tpu_custom_call.1']
    #allocation5 [shape = 'u8[51200]{0}', space=vmem, size = 0xc800, scoped, tag = 'input window, operand 4, single buffered']
    #allocation6 [shape = 's32[1]{0}', space=sflag, size = 0x4, scoped, tag = 'scoped memory for tpu_custom_call.1']
    #allocation7 [shape = 'u8[40960]{0}', space=vmem, size = 0xa000, scoped, tag = 'input window, operand 8, single buffered']
    #allocation8 [shape = 'u8[32768]{0}', space=vmem, size = 0x8000, scoped, tag = 'input window, operand 10, single buffered']
    #allocation9 [shape = 's32[1]{0}', space=sflag, size = 0x4, scoped, tag = 'scoped memory for tpu_custom_call.1']
    #allocation10 [shape = 'u8[32768]{0}', space=vmem, size = 0x8000, scoped, tag = 'input window, operand 12, single buffered']
    #allocation11 [shape = 'u8[32768]{0}', space=vmem, size = 0x8000, scoped, tag = 'input window, operand 14, single buffered']
    #allocation12 [shape = 's32[1]{0}', space=sflag, size = 0x4, scoped, tag = 'scoped memory for tpu_custom_call.1']
    #allocation13 [shape = 'u8[32768]{0}', space=vmem, size = 0x8000, scoped, tag = 'input window, operand 15, single buffered']
    #allocation14 [shape = 'u8[1024]{0}', space=vmem, size = 0x400, scoped, tag = 'output window, operand 0, single buffered']
    %22 = vsyncpa [#allocation3], 0
    %23 = vsyncpa [#allocation6], 0
    %24 = vsyncpa [#allocation9], 0
    %25 = vsyncpa [#allocation12], 0
    %26 = vsyncpa [#allocation4], 0
    // Predicated region
    $region2: #{tpu_custom_call.1} parent=1 // pred_check
      _
    $region3: #{tpu_custom_call.1} parent=1 // pred_check_branch
      %28 = sbr.rel (0) target = $region5
    $region4: #{tpu_custom_call.1} parent=1 // pred_region
      _
    $region5: #{tpu_custom_call.1} parent=1 // pred_fallthru
      _
    // Predicated region
    $region6: #{tpu_custom_call.1} parent=1 // pred_check
      _
    $region7: #{tpu_custom_call.1} parent=1 // pred_check_branch
      %30 = sbr.rel (0) target = $region9
    $region8: #{tpu_custom_call.1} parent=1 // pred_region
      _
    $region9: #{tpu_custom_call.1} parent=1 // pred_fallthru
      _
    // Predicated region
    $region10: #{tpu_custom_call.1} parent=1 // pred_check
      _
    $region11: #{tpu_custom_call.1} parent=1 // pred_check_branch
      %32 = sbr.rel (0) target = $region13
    $region12: #{tpu_custom_call.1} parent=1 // pred_region
      %s34 = ssub.s32 1600, 1600
      %35 = vsyncadd [#allocation3], %s34
      %s36 = sshll.u32 [#allocation2], 4
      %s37 = int_to_ptr.vmem [resolvable:$true] %s36
      %42 = dma.hbm_to_vmem [thread:$0]  %s2, 1600, %s37, [#allocation3], 64, 64, 4
    $region13: #{tpu_custom_call.1} parent=1 // pred_fallthru
      _
    // Predicated region
    $region14: #{tpu_custom_call.1} parent=1 // pred_check
      _
    $region15: #{tpu_custom_call.1} parent=1 // pred_check_branch
      %44 = sbr.rel (0) target = $region17
    $region16: #{tpu_custom_call.1} parent=1 // pred_region
      _
    $region17: #{tpu_custom_call.1} parent=1 // pred_fallthru
      _
    // Predicated region
    $region18: #{tpu_custom_call.1} parent=1 // pred_check
      _
    $region19: #{tpu_custom_call.1} parent=1 // pred_check_branch
      %46 = sbr.rel (0) target = $region21
    $region20: #{tpu_custom_call.1} parent=1 // pred_region
      %s48 = ssub.s32 1600, 1600
      %49 = vsyncadd [#allocation6], %s48
      %s50 = sshll.u32 [#allocation5], 4
      %s51 = int_to_ptr.vmem [resolvable:$true] %s50
      %56 = dma.hbm_to_vmem [thread:$0]  %s4, 1600, %s51, [#allocation6], 64, 64, 4
    $region21: #{tpu_custom_call.1} parent=1 // pred_fallthru
      _
    // Predicated region
    $region22: #{tpu_custom_call.1} parent=1 // pred_check
      _
    $region23: #{tpu_custom_call.1} parent=1 // pred_check_branch
      %58 = sbr.rel (0) target = $region25
    $region24: #{tpu_custom_call.1} parent=1 // pred_region
      _
    $region25: #{tpu_custom_call.1} parent=1 // pred_fallthru
      _
    // Predicated region
    $region26: #{tpu_custom_call.1} parent=1 // pred_check
      _
    $region27: #{tpu_custom_call.1} parent=1 // pred_check_branch
      %60 = sbr.rel (0) target = $region29
    $region28: #{tpu_custom_call.1} parent=1 // pred_region
      _
    $region29: #{tpu_custom_call.1} parent=1 // pred_fallthru
      _
    // Predicated region
    $region30: #{tpu_custom_call.1} parent=1 // pred_check
      _
    $region31: #{tpu_custom_call.1} parent=1 // pred_check_branch
      %62 = sbr.rel (0) target = $region33
    $region32: #{tpu_custom_call.1} parent=1 // pred_region
      _
    $region33: #{tpu_custom_call.1} parent=1 // pred_fallthru
      _
    // Predicated region
    $region34: #{tpu_custom_call.1} parent=1 // pred_check
      _
    $region35: #{tpu_custom_call.1} parent=1 // pred_check_branch
      %64 = sbr.rel (0) target = $region37
    $region36: #{tpu_custom_call.1} parent=1 // pred_region
      %s66 = ssub.s32 1280, 1280
      %67 = vsyncadd [#allocation6], %s66
      %s68 = sshll.u32 [#allocation7], 4
      %s69 = int_to_ptr.vmem [resolvable:$true] %s68
      %74 = dma.hbm_to_vmem [thread:$0]  %s8, 1280, %s69, [#allocation6], 64, 64, 4
    $region37: #{tpu_custom_call.1} parent=1 // pred_fallthru
      _
    // Predicated region
    $region38: #{tpu_custom_call.1} parent=1 // pred_check
      _
    $region39: #{tpu_custom_call.1} parent=1 // pred_check_branch
      %76 = sbr.rel (0) target = $region41
    $region40: #{tpu_custom_call.1} parent=1 // pred_region
      _
    $region41: #{tpu_custom_call.1} parent=1 // pred_fallthru
      _
    // Predicated region
    $region42: #{tpu_custom_call.1} parent=1 // pred_check
      _
    $region43: #{tpu_custom_call.1} parent=1 // pred_check_branch
      %78 = sbr.rel (0) target = $region45
    $region44: #{tpu_custom_call.1} parent=1 // pred_region
      %s80 = ssub.s32 1024, 1024
      %81 = vsyncadd [#allocation9], %s80
      %s82 = sshll.u32 [#allocation8], 4
      %s83 = int_to_ptr.vmem [resolvable:$true] %s82
      %88 = dma.hbm_to_vmem [thread:$0]  %s10, 1024, %s83, [#allocation9], 64, 64, 4
    $region45: #{tpu_custom_call.1} parent=1 // pred_fallthru
      _
    // Predicated region
    $region46: #{tpu_custom_call.1} parent=1 // pred_check
      _
    $region47: #{tpu_custom_call.1} parent=1 // pred_check_branch
      %90 = sbr.rel (0) target = $region49
    $region48: #{tpu_custom_call.1} parent=1 // pred_region
      _
    $region49: #{tpu_custom_call.1} parent=1 // pred_fallthru
      _
    // Predicated region
    $region50: #{tpu_custom_call.1} parent=1 // pred_check
      _
    $region51: #{tpu_custom_call.1} parent=1 // pred_check_branch
      %92 = sbr.rel (0) target = $region53
    $region52: #{tpu_custom_call.1} parent=1 // pred_region
      %s94 = ssub.s32 1024, 1024
      %95 = vsyncadd [#allocation9], %s94
      %s96 = sshll.u32 [#allocation10], 4
      %s97 = int_to_ptr.vmem [resolvable:$true] %s96
      %102 = dma.hbm_to_vmem [thread:$0]  %s12, 1024, %s97, [#allocation9], 64, 64, 4
    $region53: #{tpu_custom_call.1} parent=1 // pred_fallthru
      _
    // Predicated region
    $region54: #{tpu_custom_call.1} parent=1 // pred_check
      _
    $region55: #{tpu_custom_call.1} parent=1 // pred_check_branch
      %104 = sbr.rel (0) target = $region57
    $region56: #{tpu_custom_call.1} parent=1 // pred_region
      _
    $region57: #{tpu_custom_call.1} parent=1 // pred_fallthru
      _
    // Predicated region
    $region58: #{tpu_custom_call.1} parent=1 // pred_check
      _
    $region59: #{tpu_custom_call.1} parent=1 // pred_check_branch
      %106 = sbr.rel (0) target = $region61
    $region60: #{tpu_custom_call.1} parent=1 // pred_region
      %s108 = ssub.s32 1024, 1024
      %109 = vsyncadd [#allocation12], %s108
      %s110 = sshll.u32 [#allocation11], 4
      %s111 = int_to_ptr.vmem [resolvable:$true] %s110
      %116 = dma.hbm_to_vmem [thread:$0]  %s14, 1024, %s111, [#allocation12], 64, 64, 4
    $region61: #{tpu_custom_call.1} parent=1 // pred_fallthru
      _
    // Predicated region
    $region62: #{tpu_custom_call.1} parent=1 // pred_check
      _
    $region63: #{tpu_custom_call.1} parent=1 // pred_check_branch
      %118 = sbr.rel (0) target = $region65
    $region64: #{tpu_custom_call.1} parent=1 // pred_region
      %s120 = ssub.s32 1024, 1024
      %121 = vsyncadd [#allocation12], %s120
      %s122 = sshll.u32 [#allocation13], 4
      %s123 = int_to_ptr.vmem [resolvable:$true] %s122
      %128 = dma.hbm_to_vmem [thread:$0]  %s15, 1024, %s123, [#allocation12], 64, 64, 4
    $region65: #{tpu_custom_call.1} parent=1 // pred_fallthru
      _
    // Predicated region
    $region66: #{tpu_custom_call.1} parent=1 // pred_check
      _
    $region67: #{tpu_custom_call.1} parent=1 // pred_check_branch
      %130 = sbr.rel (0) target = $region69
    $region68: #{tpu_custom_call.1} parent=1 // pred_region
      _
    $region69: #{tpu_custom_call.1} parent=1 // pred_fallthru
      _
    // Predicated region
    $region70: #{tpu_custom_call.1} parent=1 // pred_check
      _
    $region71: #{tpu_custom_call.1} parent=1 // pred_check_branch
      %132 = sbr.rel (0) target = $region73
    $region72: #{tpu_custom_call.1} parent=1 // pred_region
      %133 = dma.done [#allocation3], 1600
    $region73: #{tpu_custom_call.1} parent=1 // pred_fallthru
      _
    // Predicated region
    $region74: #{tpu_custom_call.1} parent=1 // pred_check
      _
    $region75: #{tpu_custom_call.1} parent=1 // pred_check_branch
      %135 = sbr.rel (0) target = $region77
    $region76: #{tpu_custom_call.1} parent=1 // pred_region
      %136 = dma.done [#allocation6], 1600
    $region77: #{tpu_custom_call.1} parent=1 // pred_fallthru
      _
    // Predicated region
    $region78: #{tpu_custom_call.1} parent=1 // pred_check
      _
    $region79: #{tpu_custom_call.1} parent=1 // pred_check_branch
      %138 = sbr.rel (0) target = $region81
    $region80: #{tpu_custom_call.1} parent=1 // pred_region
      %139 = dma.done [#allocation6], 1280
    $region81: #{tpu_custom_call.1} parent=1 // pred_fallthru
      _
    // Predicated region
    $region82: #{tpu_custom_call.1} parent=1 // pred_check
      _
    $region83: #{tpu_custom_call.1} parent=1 // pred_check_branch
      %141 = sbr.rel (0) target = $region85
    $region84: #{tpu_custom_call.1} parent=1 // pred_region
      %142 = dma.done [#allocation9], 1024
    $region85: #{tpu_custom_call.1} parent=1 // pred_fallthru
      _
    // Predicated region
    $region86: #{tpu_custom_call.1} parent=1 // pred_check
      _
    $region87: #{tpu_custom_call.1} parent=1 // pred_check_branch
      %144 = sbr.rel (0) target = $region89
    $region88: #{tpu_custom_call.1} parent=1 // pred_region
      %145 = dma.done [#allocation9], 1024
    $region89: #{tpu_custom_call.1} parent=1 // pred_fallthru
      _
    // Predicated region
    $region90: #{tpu_custom_call.1} parent=1 // pred_check
      _
    $region91: #{tpu_custom_call.1} parent=1 // pred_check_branch
      %147 = sbr.rel (0) target = $region93
    $region92: #{tpu_custom_call.1} parent=1 // pred_region
      %148 = dma.done [#allocation12], 1024
    $region93: #{tpu_custom_call.1} parent=1 // pred_fallthru
      _
    // Predicated region
    $region94: #{tpu_custom_call.1} parent=1 // pred_check
      _
    $region95: #{tpu_custom_call.1} parent=1 // pred_check_branch
      %150 = sbr.rel (0) target = $region97
    $region96: #{tpu_custom_call.1} parent=1 // pred_region
      %151 = dma.done [#allocation12], 1024
    $region97: #{tpu_custom_call.1} parent=1 // pred_fallthru
      _
    %v153 = vld [vmem:[%s0] sm:$0xf]
    %v154 = vld [vmem:[%s0 + $0x4] sm:$0xf]
    %v155 = vld [vmem:[%s0 + $0x8] sm:$0x3]
    %v156 = vld [vmem:[%s0 + $0xc] sm:$0xf]
    %v157 = vld [vmem:[%s0 + $0x10] sm:$0xf]
    %v158 = vld [vmem:[%s0 + $0x14] sm:$0x3]
    %v159 = vld [vmem:[%s1] sm:$0xf]
    %v160 = vld [vmem:[%s1 + $0x4] sm:$0x3]
    %v161 = vld [vmem:[%s1 + $0x8] sm:$0xf]
    %v162 = vld [vmem:[%s1 + $0xc] sm:$0x3]
    %v163 = vld [vmem:[%s6] sm:$0xf]
    %v164 = vld [vmem:[%s6 + $0x4] sm:$0xf]
    %v165 = vld [vmem:[%s6 + $0x8] sm:$0xf]
    %v166 = vld [vmem:[%s6 + $0xc] sm:$0xf]
    %vm167 = vsmask.f32 3328
    %vm168 = vsmask.f32 7440
    %vm169 = vmor %vm167, %vm168
    %v171 = vshrl.u32 %v159, 16
    %v173 = vrot.slane %v171, 4
    %v174 = vshll.u32 %v159, 16
    %v176 = vrot.slane %v174, 5
    %v177 = vor.u32 %v173, %v176
    %v178 = vrot.slane %v177, 4
    %v180 = vshll.u32 %v160, 16
    %v182 = vrot.slane %v180, 5
    %v183 = vsel %vm169, %v178, %v182
    %v185 = vshrl.u32 %v161, 16
    %v187 = vrot.slane %v185, 4
    %v188 = vshll.u32 %v161, 16
    %v190 = vrot.slane %v188, 5
    %v191 = vor.u32 %v187, %v190
    %v192 = vrot.slane %v191, 4
    %v194 = vshll.u32 %v162, 16
    %v196 = vrot.slane %v194, 5
    %v197 = vsel %vm169, %v192, %v196
    %s198 = scalar_lea.vmem %s6, 16
    %v199 = vld [vmem:[%s198] sm:$0xf]
    %v200 = vld [vmem:[%s198 + $0x4] sm:$0xf]
    %v201 = vld [vmem:[%s198 + $0x8] sm:$0xf]
    %v202 = vld [vmem:[%s198 + $0xc] sm:$0xf]
    %v203 = vunpack.c.l.b16 %v183
    %v204 = vunpack.c.l.b16 %v197
    %v205 = vpack.c.b16 %v204, %v203
    %v210 = vunpack.c.l.b16 %v199
    %v211 = vunpack.c.l.b16 %v200
    %v212 = vunpack.c.l.b16 %v201
    %v213 = vunpack.c.l.b16 %v202
    %v214 = vpack.c.b16 %v211, %v210
    %v215 = vpack.c.b16 %v213, %v212
    %vm218 = vcmask 261120
    %v220 = vsel %vm218, %v205, 0
    %222 = vmatprep.subr.bf16.mxu0 0
    %223 = vmatpush1.bf16.msra.mxu0 %v214
    %224 = vmatprep.subr.bf16.mxu0 0
    %225 = vmatpush1.bf16.msra.mxu0 %v215
    %226 = vmatprep.subr.bf16.mxu0 0
    %227 = vmatpush1.bf16.msra.mxu0 0
    %228 = vmatprep.subr.bf16.mxu0 0
    %229 = vmatpush1.bf16.msra.mxu0 0
    %230 = vmatprep.subr.bf16.mxu0 0
    %231 = vmatpush1.bf16.msra.mxu0 0
    %232 = vmatprep.subr.bf16.mxu0 0
    %233 = vmatpush1.bf16.msra.mxu0 0
    %234 = vmatprep.subr.bf16.mxu0 0
    %235 = vmatpush1.bf16.msra.mxu0 0
    %236 = vmatprep.subr.bf16.mxu0 0
    %237 = vmatpush1.bf16.msra.mxu0 0
    %238 = vmatprep.subr.bf16.mxu0 0
    %239 = vmatpush1.bf16.msra.mxu0 0
    %240 = vmatprep.subr.bf16.mxu0 0
    %241 = vmatpush1.bf16.msra.mxu0 0
    %242 = vmatprep.subr.bf16.mxu0 0
    %243 = vmatpush1.bf16.msra.mxu0 0
    %244 = vmatprep.subr.bf16.mxu0 0
    %245 = vmatpush1.bf16.msra.mxu0 0
    %246 = vmatprep.subr.bf16.mxu0 0
    %247 = vmatpush1.bf16.msra.mxu0 0
    %248 = vmatprep.subr.bf16.mxu0 0
    %249 = vmatpush1.bf16.msra.mxu0 0
    %250 = vmatprep.subr.bf16.mxu0 0
    %251 = vmatpush1.bf16.msra.mxu0 0
    %252 = vmatprep.subr.bf16.mxu0 0
    %253 = vmatpush1.bf16.msra.mxu0 0
    %254 = vmatprep.mubr.bf16.mxu0 0
    %255 = vmatmul.mubr.bf16.gmra.mrb[0].mxu0 %v220
    %v256 = vpop.f32.mrb[0].mxu0
    %v257 = vadd.f32 0.0, %v256
    %v258 = vpop.f32.mrb[0].mxu0
    %v259 = vpop.f32.mrb[0].mxu0
    %v260 = vadd.f32 0.0, %v259
    %v261 = vpop.f32.mrb[0].mxu0
    %262 = vdwg.mxu0
    %v265 = vunpack.c.l.b16 %v159
    %v266 = vunpack.c.l.b16 %v161
    %v267 = vpack.c.b16 %v266, %v265
    %v272 = vunpack.c.l.b16 %v163
    %v273 = vunpack.c.l.b16 %v164
    %v274 = vunpack.c.l.b16 %v165
    %v275 = vunpack.c.l.b16 %v166
    %v276 = vpack.c.b16 %v273, %v272
    %v277 = vpack.c.b16 %v275, %v274
    %v281 = vsel %vm218, %v267, 0
    %283 = vmatprep.subr.bf16.mxu0 0
    %284 = vmatpush1.bf16.msra.mxu0 %v276
    %285 = vmatprep.subr.bf16.mxu0 0
    %286 = vmatpush1.bf16.msra.mxu0 %v277
    %287 = vmatprep.subr.bf16.mxu0 0
    %288 = vmatpush1.bf16.msra.mxu0 0
    %289 = vmatprep.subr.bf16.mxu0 0
    %290 = vmatpush1.bf16.msra.mxu0 0
    %291 = vmatprep.subr.bf16.mxu0 0
    %292 = vmatpush1.bf16.msra.mxu0 0
    %293 = vmatprep.subr.bf16.mxu0 0
    %294 = vmatpush1.bf16.msra.mxu0 0
    %295 = vmatprep.subr.bf16.mxu0 0
    %296 = vmatpush1.bf16.msra.mxu0 0
    %297 = vmatprep.subr.bf16.mxu0 0
    %298 = vmatpush1.bf16.msra.mxu0 0
    %299 = vmatprep.subr.bf16.mxu0 0
    %300 = vmatpush1.bf16.msra.mxu0 0
    %301 = vmatprep.subr.bf16.mxu0 0
    %302 = vmatpush1.bf16.msra.mxu0 0
    %303 = vmatprep.subr.bf16.mxu0 0
    %304 = vmatpush1.bf16.msra.mxu0 0
    %305 = vmatprep.subr.bf16.mxu0 0
    %306 = vmatpush1.bf16.msra.mxu0 0
    %307 = vmatprep.subr.bf16.mxu0 0
    %308 = vmatpush1.bf16.msra.mxu0 0
    %309 = vmatprep.subr.bf16.mxu0 0
    %310 = vmatpush1.bf16.msra.mxu0 0
    %311 = vmatprep.subr.bf16.mxu0 0
    %312 = vmatpush1.bf16.msra.mxu0 0
    %313 = vmatprep.subr.bf16.mxu0 0
    %314 = vmatpush1.bf16.msra.mxu0 0
    %315 = vmatprep.mubr.bf16.mxu0 0
    %316 = vmatmul.mubr.bf16.gmra.mrb[0].mxu0 %v281
    %v317 = vpop.f32.mrb[0].mxu0
    %v318 = vadd.f32 %v257, %v317
    %v319 = vpop.f32.mrb[0].mxu0
    %v320 = vpop.f32.mrb[0].mxu0
    %v321 = vadd.f32 %v260, %v320
    %v322 = vpop.f32.mrb[0].mxu0
    %323 = vdwg.mxu0
    %vm326 = vcmask 1042432
    %vm327 = vcmask 1046532
    %vm328 = vmor %vm326, %vm327
    %v329 = vrot.slane %v159, 5
    %v330 = vrot.slane %v329, 4
    %v331 = vrot.slane %v160, 5
    %v332 = vsel %vm328, %v330, %v331
    %v333 = vrot.slane %v161, 5
    %v334 = vrot.slane %v333, 4
    %v335 = vrot.slane %v162, 5
    %v336 = vsel %vm328, %v334, %v335
    %s337 = scalar_lea.vmem %s6, 32
    %v338 = vld [vmem:[%s337] sm:$0xf]
    %v339 = vld [vmem:[%s337 + $0x4] sm:$0xf]
    %v340 = vld [vmem:[%s337 + $0x8] sm:$0xf]
    %v341 = vld [vmem:[%s337 + $0xc] sm:$0xf]
    %v342 = vunpack.c.l.b16 %v332
    %v343 = vunpack.c.l.b16 %v336
    %v344 = vpack.c.b16 %v343, %v342
    %v349 = vunpack.c.l.b16 %v338
    %v350 = vunpack.c.l.b16 %v339
    %v351 = vunpack.c.l.b16 %v340
    %v352 = vunpack.c.l.b16 %v341
    %v353 = vpack.c.b16 %v350, %v349
    %v354 = vpack.c.b16 %v352, %v351
    %v358 = vsel %vm218, %v344, 0
    %360 = vmatprep.subr.bf16.mxu0 0
    %361 = vmatpush1.bf16.msra.mxu0 %v353
    %362 = vmatprep.subr.bf16.mxu0 0
    %363 = vmatpush1.bf16.msra.mxu0 %v354
    %364 = vmatprep.subr.bf16.mxu0 0
    %365 = vmatpush1.bf16.msra.mxu0 0
    %366 = vmatprep.subr.bf16.mxu0 0
    %367 = vmatpush1.bf16.msra.mxu0 0
    %368 = vmatprep.subr.bf16.mxu0 0
    %369 = vmatpush1.bf16.msra.mxu0 0
    %370 = vmatprep.subr.bf16.mxu0 0
    %371 = vmatpush1.bf16.msra.mxu0 0
    %372 = vmatprep.subr.bf16.mxu0 0
    %373 = vmatpush1.bf16.msra.mxu0 0
    %374 = vmatprep.subr.bf16.mxu0 0
    %375 = vmatpush1.bf16.msra.mxu0 0
    %376 = vmatprep.subr.bf16.mxu0 0
    %377 = vmatpush1.bf16.msra.mxu0 0
    %378 = vmatprep.subr.bf16.mxu0 0
    %379 = vmatpush1.bf16.msra.mxu0 0
    %380 = vmatprep.subr.bf16.mxu0 0
    %381 = vmatpush1.bf16.msra.mxu0 0
    %382 = vmatprep.subr.bf16.mxu0 0
    %383 = vmatpush1.bf16.msra.mxu0 0
    %384 = vmatprep.subr.bf16.mxu0 0
    %385 = vmatpush1.bf16.msra.mxu0 0
    %386 = vmatprep.subr.bf16.mxu0 0
    %387 = vmatpush1.bf16.msra.mxu0 0
    %388 = vmatprep.subr.bf16.mxu0 0
    %389 = vmatpush1.bf16.msra.mxu0 0
    %390 = vmatprep.subr.bf16.mxu0 0
    %391 = vmatpush1.bf16.msra.mxu0 0
    %392 = vmatprep.mubr.bf16.mxu0 0
    %393 = vmatmul.mubr.bf16.gmra.mrb[0].mxu0 %v358
    %v394 = vpop.f32.mrb[0].mxu0
    %v395 = vadd.f32 0.0, %v394
    %v396 = vpop.f32.mrb[0].mxu0
    %v397 = vpop.f32.mrb[0].mxu0
    %v398 = vadd.f32 0.0, %v397
    %v399 = vpop.f32.mrb[0].mxu0
    %400 = vdwg.mxu0
    %v401 = vadd.f32 %v318, %v395
    %v402 = vadd.f32 %v321, %v398
    %vm403 = vsmask.f32 2304
    %vm404 = vsmask.f32 6416
    %vm405 = vmor %vm403, %vm404
    %v406 = vrot.slane %v171, 5
    %v407 = vrot.slane %v174, 6
    %v408 = vor.u32 %v406, %v407
    %v409 = vrot.slane %v408, 4
    %v410 = vshrl.u32 %v160, 16
    %v412 = vrot.slane %v410, 5
    %v413 = vrot.slane %v180, 6
    %v414 = vor.u32 %v412, %v413
    %v415 = vsel %vm405, %v409, %v414
    %v416 = vrot.slane %v185, 5
    %v417 = vrot.slane %v188, 6
    %v418 = vor.u32 %v416, %v417
    %v419 = vrot.slane %v418, 4
    %v420 = vshrl.u32 %v162, 16
    %v422 = vrot.slane %v420, 5
    %v423 = vrot.slane %v194, 6
    %v424 = vor.u32 %v422, %v423
    %v425 = vsel %vm405, %v419, %v424
    %s426 = scalar_lea.vmem %s6, 48
    %v427 = vld [vmem:[%s426] sm:$0xf]
    %v428 = vld [vmem:[%s426 + $0x4] sm:$0xf]
    %v429 = vld [vmem:[%s426 + $0x8] sm:$0xf]
    %v430 = vld [vmem:[%s426 + $0xc] sm:$0xf]
    %v431 = vunpack.c.l.b16 %v415
    %v432 = vunpack.c.l.b16 %v425
    %v433 = vpack.c.b16 %v432, %v431
    %v438 = vunpack.c.l.b16 %v427
    %v439 = vunpack.c.l.b16 %v428
    %v440 = vunpack.c.l.b16 %v429
    %v441 = vunpack.c.l.b16 %v430
    %v442 = vpack.c.b16 %v439, %v438
    %v443 = vpack.c.b16 %v441, %v440
    %v447 = vsel %vm218, %v433, 0
    %449 = vmatprep.subr.bf16.mxu0 0
    %450 = vmatpush1.bf16.msra.mxu0 %v442
    %451 = vmatprep.subr.bf16.mxu0 0
    %452 = vmatpush1.bf16.msra.mxu0 %v443
    %453 = vmatprep.subr.bf16.mxu0 0
    %454 = vmatpush1.bf16.msra.mxu0 0
    %455 = vmatprep.subr.bf16.mxu0 0
    %456 = vmatpush1.bf16.msra.mxu0 0
    %457 = vmatprep.subr.bf16.mxu0 0
    %458 = vmatpush1.bf16.msra.mxu0 0
    %459 = vmatprep.subr.bf16.mxu0 0
    %460 = vmatpush1.bf16.msra.mxu0 0
    %461 = vmatprep.subr.bf16.mxu0 0
    %462 = vmatpush1.bf16.msra.mxu0 0
    %463 = vmatprep.subr.bf16.mxu0 0
    %464 = vmatpush1.bf16.msra.mxu0 0
    %465 = vmatprep.subr.bf16.mxu0 0
    %466 = vmatpush1.bf16.msra.mxu0 0
    %467 = vmatprep.subr.bf16.mxu0 0
    %468 = vmatpush1.bf16.msra.mxu0 0
    %469 = vmatprep.subr.bf16.mxu0 0
    %470 = vmatpush1.bf16.msra.mxu0 0
    %471 = vmatprep.subr.bf16.mxu0 0
    %472 = vmatpush1.bf16.msra.mxu0 0
    %473 = vmatprep.subr.bf16.mxu0 0
    %474 = vmatpush1.bf16.msra.mxu0 0
    %475 = vmatprep.subr.bf16.mxu0 0
    %476 = vmatpush1.bf16.msra.mxu0 0
    %477 = vmatprep.subr.bf16.mxu0 0
    %478 = vmatpush1.bf16.msra.mxu0 0
    %479 = vmatprep.subr.bf16.mxu0 0
    %480 = vmatpush1.bf16.msra.mxu0 0
    %481 = vmatprep.mubr.bf16.mxu0 0
    %482 = vmatmul.mubr.bf16.gmra.mrb[0].mxu0 %v447
    %v483 = vpop.f32.mrb[0].mxu0
    %v484 = vadd.f32 0.0, %v483
    %v485 = vpop.f32.mrb[0].mxu0
    %v486 = vpop.f32.mrb[0].mxu0
    %v487 = vadd.f32 0.0, %v486
    %v488 = vpop.f32.mrb[0].mxu0
    %489 = vdwg.mxu0
    %v490 = vadd.f32 %v401, %v484
    %v491 = vadd.f32 %v402, %v487
    %vm492 = vcmask 1041408
    %vm493 = vcmask 1045508
    %vm494 = vmor %vm492, %vm493
    %v495 = vrot.slane %v159, 6
    %v496 = vrot.slane %v495, 4
    %v497 = vrot.slane %v160, 6
    %v498 = vsel %vm494, %v496, %v497
    %v499 = vrot.slane %v161, 6
    %v500 = vrot.slane %v499, 4
    %v501 = vrot.slane %v162, 6
    %v502 = vsel %vm494, %v500, %v501
    %s503 = scalar_lea.vmem %s6, 64
    %v504 = vld [vmem:[%s503] sm:$0xf]
    %v505 = vld [vmem:[%s503 + $0x4] sm:$0xf]
    %v506 = vld [vmem:[%s503 + $0x8] sm:$0xf]
    %v507 = vld [vmem:[%s503 + $0xc] sm:$0xf]
    %v508 = vunpack.c.l.b16 %v498
    %v509 = vunpack.c.l.b16 %v502
    %v510 = vpack.c.b16 %v509, %v508
    %v515 = vunpack.c.l.b16 %v504
    %v516 = vunpack.c.l.b16 %v505
    %v517 = vunpack.c.l.b16 %v506
    %v518 = vunpack.c.l.b16 %v507
    %v519 = vpack.c.b16 %v516, %v515
    %v520 = vpack.c.b16 %v518, %v517
    %v524 = vsel %vm218, %v510, 0
    %526 = vmatprep.subr.bf16.mxu0 0
    %527 = vmatpush1.bf16.msra.mxu0 %v519
    %528 = vmatprep.subr.bf16.mxu0 0
    %529 = vmatpush1.bf16.msra.mxu0 %v520
    %530 = vmatprep.subr.bf16.mxu0 0
    %531 = vmatpush1.bf16.msra.mxu0 0
    %532 = vmatprep.subr.bf16.mxu0 0
    %533 = vmatpush1.bf16.msra.mxu0 0
    %534 = vmatprep.subr.bf16.mxu0 0
    %535 = vmatpush1.bf16.msra.mxu0 0
    %536 = vmatprep.subr.bf16.mxu0 0
    %537 = vmatpush1.bf16.msra.mxu0 0
    %538 = vmatprep.subr.bf16.mxu0 0
    %539 = vmatpush1.bf16.msra.mxu0 0
    %540 = vmatprep.subr.bf16.mxu0 0
    %541 = vmatpush1.bf16.msra.mxu0 0
    %542 = vmatprep.subr.bf16.mxu0 0
    %543 = vmatpush1.bf16.msra.mxu0 0
    %544 = vmatprep.subr.bf16.mxu0 0
    %545 = vmatpush1.bf16.msra.mxu0 0
    %546 = vmatprep.subr.bf16.mxu0 0
    %547 = vmatpush1.bf16.msra.mxu0 0
    %548 = vmatprep.subr.bf16.mxu0 0
    %549 = vmatpush1.bf16.msra.mxu0 0
    %550 = vmatprep.subr.bf16.mxu0 0
    %551 = vmatpush1.bf16.msra.mxu0 0
    %552 = vmatprep.subr.bf16.mxu0 0
    %553 = vmatpush1.bf16.msra.mxu0 0
    %554 = vmatprep.subr.bf16.mxu0 0
    %555 = vmatpush1.bf16.msra.mxu0 0
    %556 = vmatprep.subr.bf16.mxu0 0
    %557 = vmatpush1.bf16.msra.mxu0 0
    %558 = vmatprep.mubr.bf16.mxu0 0
    %559 = vmatmul.mubr.bf16.gmra.mrb[0].mxu0 %v524
    %v560 = vpop.f32.mrb[0].mxu0
    %v561 = vadd.f32 0.0, %v560
    %v562 = vpop.f32.mrb[0].mxu0
    %v563 = vpop.f32.mrb[0].mxu0
    %v564 = vadd.f32 0.0, %v563
    %v565 = vpop.f32.mrb[0].mxu0
    %566 = vdwg.mxu0
    %v567 = vadd.f32 %v490, %v561
    %v568 = vadd.f32 %v491, %v564
    %v569 = vld [vmem:[%s7] sm:$0x1]
    %v571 = vlaneseq
    %v572 = vshrl.u32 %v571, 7
    %v573 = vsub.s32 0, %v572
    %v574 = vrot.slane %v569, %v573
    %v576 = vadd.f32 %v567, %v574
    %v577 = vadd.f32 %v568, %v574
    %v578 = vld [vmem:[#allocation7] sm:$0xf]
    %v579 = vld [vmem:[#allocation7 + $0x4] sm:$0xf]
    %v580 = vld [vmem:[#allocation7 + $0x8] sm:$0xf]
    %v581 = vld [vmem:[#allocation7 + $0xc] sm:$0xf]
    %s582 = scalar_lea.vmem [#allocation7], 16
    %v583 = vld [vmem:[%s582] sm:$0xf]
    %v584 = vld [vmem:[%s582 + $0x4] sm:$0xf]
    %v585 = vld [vmem:[%s582 + $0x8] sm:$0xf]
    %v586 = vld [vmem:[%s582 + $0xc] sm:$0xf]
    %v591 = vunpack.c.l.b16 %v583
    %v592 = vunpack.c.l.b16 %v584
    %v593 = vunpack.c.l.b16 %v585
    %v594 = vunpack.c.l.b16 %v586
    %v595 = vpack.c.b16 %v592, %v591
    %v596 = vpack.c.b16 %v594, %v593
    %599 = vmatprep.subr.bf16.mxu0 0
    %600 = vmatpush1.bf16.msra.mxu0 %v595
    %601 = vmatprep.subr.bf16.mxu0 0
    %602 = vmatpush1.bf16.msra.mxu0 %v596
    %603 = vmatprep.subr.bf16.mxu0 0
    %604 = vmatpush1.bf16.msra.mxu0 0
    %605 = vmatprep.subr.bf16.mxu0 0
    %606 = vmatpush1.bf16.msra.mxu0 0
    %607 = vmatprep.subr.bf16.mxu0 0
    %608 = vmatpush1.bf16.msra.mxu0 0
    %609 = vmatprep.subr.bf16.mxu0 0
    %610 = vmatpush1.bf16.msra.mxu0 0
    %611 = vmatprep.subr.bf16.mxu0 0
    %612 = vmatpush1.bf16.msra.mxu0 0
    %613 = vmatprep.subr.bf16.mxu0 0
    %614 = vmatpush1.bf16.msra.mxu0 0
    %615 = vmatprep.subr.bf16.mxu0 0
    %616 = vmatpush1.bf16.msra.mxu0 0
    %617 = vmatprep.subr.bf16.mxu0 0
    %618 = vmatpush1.bf16.msra.mxu0 0
    %619 = vmatprep.subr.bf16.mxu0 0
    %620 = vmatpush1.bf16.msra.mxu0 0
    %621 = vmatprep.subr.bf16.mxu0 0
    %622 = vmatpush1.bf16.msra.mxu0 0
    %623 = vmatprep.subr.bf16.mxu0 0
    %624 = vmatpush1.bf16.msra.mxu0 0
    %625 = vmatprep.subr.bf16.mxu0 0
    %626 = vmatpush1.bf16.msra.mxu0 0
    %627 = vmatprep.subr.bf16.mxu0 0
    %628 = vmatpush1.bf16.msra.mxu0 0
    %629 = vmatprep.subr.bf16.mxu0 0
    %630 = vmatpush1.bf16.msra.mxu0 0
    %631 = vmatprep.mubr.bf16.mxu0 0
    %632 = vmatmul.mubr.bf16.gmra.mrb[0].mxu0 %v220
    %v633 = vpop.f32.mrb[0].mxu0
    %v634 = vadd.f32 0.0, %v633
    %v635 = vpop.f32.mrb[0].mxu0
    %v636 = vpop.f32.mrb[0].mxu0
    %v637 = vadd.f32 0.0, %v636
    %v638 = vpop.f32.mrb[0].mxu0
    %639 = vdwg.mxu0
    %v644 = vunpack.c.l.b16 %v578
    %v645 = vunpack.c.l.b16 %v579
    %v646 = vunpack.c.l.b16 %v580
    %v647 = vunpack.c.l.b16 %v581
    %v648 = vpack.c.b16 %v645, %v644
    %v649 = vpack.c.b16 %v647, %v646
    %652 = vmatprep.subr.bf16.mxu0 0
    %653 = vmatpush1.bf16.msra.mxu0 %v648
    %654 = vmatprep.subr.bf16.mxu0 0
    %655 = vmatpush1.bf16.msra.mxu0 %v649
    %656 = vmatprep.subr.bf16.mxu0 0
    %657 = vmatpush1.bf16.msra.mxu0 0
    %658 = vmatprep.subr.bf16.mxu0 0
    %659 = vmatpush1.bf16.msra.mxu0 0
    %660 = vmatprep.subr.bf16.mxu0 0
    %661 = vmatpush1.bf16.msra.mxu0 0
    %662 = vmatprep.subr.bf16.mxu0 0
    %663 = vmatpush1.bf16.msra.mxu0 0
    %664 = vmatprep.subr.bf16.mxu0 0
    %665 = vmatpush1.bf16.msra.mxu0 0
    %666 = vmatprep.subr.bf16.mxu0 0
    %667 = vmatpush1.bf16.msra.mxu0 0
    %668 = vmatprep.subr.bf16.mxu0 0
    %669 = vmatpush1.bf16.msra.mxu0 0
    %670 = vmatprep.subr.bf16.mxu0 0
    %671 = vmatpush1.bf16.msra.mxu0 0
    %672 = vmatprep.subr.bf16.mxu0 0
    %673 = vmatpush1.bf16.msra.mxu0 0
    %674 = vmatprep.subr.bf16.mxu0 0
    %675 = vmatpush1.bf16.msra.mxu0 0
    %676 = vmatprep.subr.bf16.mxu0 0
    %677 = vmatpush1.bf16.msra.mxu0 0
    %678 = vmatprep.subr.bf16.mxu0 0
    %679 = vmatpush1.bf16.msra.mxu0 0
    %680 = vmatprep.subr.bf16.mxu0 0
    %681 = vmatpush1.bf16.msra.mxu0 0
    %682 = vmatprep.subr.bf16.mxu0 0
    %683 = vmatpush1.bf16.msra.mxu0 0
    %684 = vmatprep.mubr.bf16.mxu0 0
    %685 = vmatmul.mubr.bf16.gmra.mrb[0].mxu0 %v281
    %v686 = vpop.f32.mrb[0].mxu0
    %v687 = vadd.f32 %v634, %v686
    %v688 = vpop.f32.mrb[0].mxu0
    %v689 = vpop.f32.mrb[0].mxu0
    %v690 = vadd.f32 %v637, %v689
    %v691 = vpop.f32.mrb[0].mxu0
    %692 = vdwg.mxu0
    %s693 = scalar_lea.vmem [#allocation7], 32
    %v694 = vld [vmem:[%s693] sm:$0xf]
    %v695 = vld [vmem:[%s693 + $0x4] sm:$0xf]
    %v696 = vld [vmem:[%s693 + $0x8] sm:$0xf]
    %v697 = vld [vmem:[%s693 + $0xc] sm:$0xf]
    %v702 = vunpack.c.l.b16 %v694
    %v703 = vunpack.c.l.b16 %v695
    %v704 = vunpack.c.l.b16 %v696
    %v705 = vunpack.c.l.b16 %v697
    %v706 = vpack.c.b16 %v703, %v702
    %v707 = vpack.c.b16 %v705, %v704
    %710 = vmatprep.subr.bf16.mxu0 0
    %711 = vmatpush1.bf16.msra.mxu0 %v706
    %712 = vmatprep.subr.bf16.mxu0 0
    %713 = vmatpush1.bf16.msra.mxu0 %v707
    %714 = vmatprep.subr.bf16.mxu0 0
    %715 = vmatpush1.bf16.msra.mxu0 0
    %716 = vmatprep.subr.bf16.mxu0 0
    %717 = vmatpush1.bf16.msra.mxu0 0
    %718 = vmatprep.subr.bf16.mxu0 0
    %719 = vmatpush1.bf16.msra.mxu0 0
    %720 = vmatprep.subr.bf16.mxu0 0
    %721 = vmatpush1.bf16.msra.mxu0 0
    %722 = vmatprep.subr.bf16.mxu0 0
    %723 = vmatpush1.bf16.msra.mxu0 0
    %724 = vmatprep.subr.bf16.mxu0 0
    %725 = vmatpush1.bf16.msra.mxu0 0
    %726 = vmatprep.subr.bf16.mxu0 0
    %727 = vmatpush1.bf16.msra.mxu0 0
    %728 = vmatprep.subr.bf16.mxu0 0
    %729 = vmatpush1.bf16.msra.mxu0 0
    %730 = vmatprep.subr.bf16.mxu0 0
    %731 = vmatpush1.bf16.msra.mxu0 0
    %732 = vmatprep.subr.bf16.mxu0 0
    %733 = vmatpush1.bf16.msra.mxu0 0
    %734 = vmatprep.subr.bf16.mxu0 0
    %735 = vmatpush1.bf16.msra.mxu0 0
    %736 = vmatprep.subr.bf16.mxu0 0
    %737 = vmatpush1.bf16.msra.mxu0 0
    %738 = vmatprep.subr.bf16.mxu0 0
    %739 = vmatpush1.bf16.msra.mxu0 0
    %740 = vmatprep.subr.bf16.mxu0 0
    %741 = vmatpush1.bf16.msra.mxu0 0
    %742 = vmatprep.mubr.bf16.mxu0 0
    %743 = vmatmul.mubr.bf16.gmra.mrb[0].mxu0 %v358
    %v744 = vpop.f32.mrb[0].mxu0
    %v745 = vadd.f32 0.0, %v744
    %v746 = vpop.f32.mrb[0].mxu0
    %v747 = vpop.f32.mrb[0].mxu0
    %v748 = vadd.f32 0.0, %v747
    %v749 = vpop.f32.mrb[0].mxu0
    %750 = vdwg.mxu0
    %v751 = vadd.f32 %v687, %v745
    %v752 = vadd.f32 %v690, %v748
    %s753 = scalar_lea.vmem [#allocation7], 48
    %v754 = vld [vmem:[%s753] sm:$0xf]
    %v755 = vld [vmem:[%s753 + $0x4] sm:$0xf]
    %v756 = vld [vmem:[%s753 + $0x8] sm:$0xf]
    %v757 = vld [vmem:[%s753 + $0xc] sm:$0xf]
    %v762 = vunpack.c.l.b16 %v754
    %v763 = vunpack.c.l.b16 %v755
    %v764 = vunpack.c.l.b16 %v756
    %v765 = vunpack.c.l.b16 %v757
    %v766 = vpack.c.b16 %v763, %v762
    %v767 = vpack.c.b16 %v765, %v764
    %770 = vmatprep.subr.bf16.mxu0 0
    %771 = vmatpush1.bf16.msra.mxu0 %v766
    %772 = vmatprep.subr.bf16.mxu0 0
    %773 = vmatpush1.bf16.msra.mxu0 %v767
    %774 = vmatprep.subr.bf16.mxu0 0
    %775 = vmatpush1.bf16.msra.mxu0 0
    %776 = vmatprep.subr.bf16.mxu0 0
    %777 = vmatpush1.bf16.msra.mxu0 0
    %778 = vmatprep.subr.bf16.mxu0 0
    %779 = vmatpush1.bf16.msra.mxu0 0
    %780 = vmatprep.subr.bf16.mxu0 0
    %781 = vmatpush1.bf16.msra.mxu0 0
    %782 = vmatprep.subr.bf16.mxu0 0
    %783 = vmatpush1.bf16.msra.mxu0 0
    %784 = vmatprep.subr.bf16.mxu0 0
    %785 = vmatpush1.bf16.msra.mxu0 0
    %786 = vmatprep.subr.bf16.mxu0 0
    %787 = vmatpush1.bf16.msra.mxu0 0
    %788 = vmatprep.subr.bf16.mxu0 0
    %789 = vmatpush1.bf16.msra.mxu0 0
    %790 = vmatprep.subr.bf16.mxu0 0
    %791 = vmatpush1.bf16.msra.mxu0 0
    %792 = vmatprep.subr.bf16.mxu0 0
    %793 = vmatpush1.bf16.msra.mxu0 0
    %794 = vmatprep.subr.bf16.mxu0 0
    %795 = vmatpush1.bf16.msra.mxu0 0
    %796 = vmatprep.subr.bf16.mxu0 0
    %797 = vmatpush1.bf16.msra.mxu0 0
    %798 = vmatprep.subr.bf16.mxu0 0
    %799 = vmatpush1.bf16.msra.mxu0 0
    %800 = vmatprep.subr.bf16.mxu0 0
    %801 = vmatpush1.bf16.msra.mxu0 0
    %802 = vmatprep.mubr.bf16.mxu0 0
    %803 = vmatmul.mubr.bf16.gmra.mrb[0].mxu0 %v447
    %v804 = vpop.f32.mrb[0].mxu0
    %v805 = vadd.f32 0.0, %v804
    %v806 = vpop.f32.mrb[0].mxu0
    %v807 = vpop.f32.mrb[0].mxu0
    %v808 = vadd.f32 0.0, %v807
    %v809 = vpop.f32.mrb[0].mxu0
    %810 = vdwg.mxu0
    %v811 = vadd.f32 %v751, %v805
    %v812 = vadd.f32 %v752, %v808
    %s813 = scalar_lea.vmem [#allocation7], 64
    %v814 = vld [vmem:[%s813] sm:$0xf]
    %v815 = vld [vmem:[%s813 + $0x4] sm:$0xf]
    %v816 = vld [vmem:[%s813 + $0x8] sm:$0xf]
    %v817 = vld [vmem:[%s813 + $0xc] sm:$0xf]
    %v822 = vunpack.c.l.b16 %v814
    %v823 = vunpack.c.l.b16 %v815
    %v824 = vunpack.c.l.b16 %v816
    %v825 = vunpack.c.l.b16 %v817
    %v826 = vpack.c.b16 %v823, %v822
    %v827 = vpack.c.b16 %v825, %v824
    %830 = vmatprep.subr.bf16.mxu0 0
    %831 = vmatpush1.bf16.msra.mxu0 %v826
    %832 = vmatprep.subr.bf16.mxu0 0
    %833 = vmatpush1.bf16.msra.mxu0 %v827
    %834 = vmatprep.subr.bf16.mxu0 0
    %835 = vmatpush1.bf16.msra.mxu0 0
    %836 = vmatprep.subr.bf16.mxu0 0
    %837 = vmatpush1.bf16.msra.mxu0 0
    %838 = vmatprep.subr.bf16.mxu0 0
    %839 = vmatpush1.bf16.msra.mxu0 0
    %840 = vmatprep.subr.bf16.mxu0 0
    %841 = vmatpush1.bf16.msra.mxu0 0
    %842 = vmatprep.subr.bf16.mxu0 0
    %843 = vmatpush1.bf16.msra.mxu0 0
    %844 = vmatprep.subr.bf16.mxu0 0
    %845 = vmatpush1.bf16.msra.mxu0 0
    %846 = vmatprep.subr.bf16.mxu0 0
    %847 = vmatpush1.bf16.msra.mxu0 0
    %848 = vmatprep.subr.bf16.mxu0 0
    %849 = vmatpush1.bf16.msra.mxu0 0
    %850 = vmatprep.subr.bf16.mxu0 0
    %851 = vmatpush1.bf16.msra.mxu0 0
    %852 = vmatprep.subr.bf16.mxu0 0
    %853 = vmatpush1.bf16.msra.mxu0 0
    %854 = vmatprep.subr.bf16.mxu0 0
    %855 = vmatpush1.bf16.msra.mxu0 0
    %856 = vmatprep.subr.bf16.mxu0 0
    %857 = vmatpush1.bf16.msra.mxu0 0
    %858 = vmatprep.subr.bf16.mxu0 0
    %859 = vmatpush1.bf16.msra.mxu0 0
    %860 = vmatprep.subr.bf16.mxu0 0
    %861 = vmatpush1.bf16.msra.mxu0 0
    %862 = vmatprep.mubr.bf16.mxu0 0
    %863 = vmatmul.mubr.bf16.gmra.mrb[0].mxu0 %v524
    %v864 = vpop.f32.mrb[0].mxu0
    %v865 = vadd.f32 0.0, %v864
    %v866 = vpop.f32.mrb[0].mxu0
    %v867 = vpop.f32.mrb[0].mxu0
    %v868 = vadd.f32 0.0, %v867
    %v869 = vpop.f32.mrb[0].mxu0
    %870 = vdwg.mxu0
    %v871 = vadd.f32 %v811, %v865
    %v872 = vadd.f32 %v812, %v868
    %v873 = vld [vmem:[%s9] sm:$0x1]
    %v875 = vlaneseq
    %v876 = vshrl.u32 %v875, 7
    %v877 = vsub.s32 0, %v876
    %v878 = vrot.slane %v873, %v877
    %v880 = vadd.f32 %v871, %v878
    %v881 = vadd.f32 %v872, %v878
    %v882 = vld [vmem:[#allocation2] sm:$0xf]
    %v883 = vld [vmem:[#allocation2 + $0x4] sm:$0xf]
    %v884 = vld [vmem:[#allocation2 + $0x8] sm:$0xf]
    %v885 = vld [vmem:[#allocation2 + $0xc] sm:$0xf]
    %v886 = vld [vmem:[#allocation2 + $0x10] sm:$0xf]
    %v888 = vshrl.u32 %v153, 16
    %v890 = vrot.slane %v888, 4
    %v891 = vshll.u32 %v153, 16
    %v893 = vrot.slane %v891, 5
    %v894 = vor.u32 %v890, %v893
    %v895 = vrot.slane %v894, 4
    %v897 = vshll.u32 %v154, 16
    %v899 = vrot.slane %v897, 5
    %v900 = vsel %vm169, %v895, %v899
    %v901 = vshrl.u32 %v154, 16
    %v903 = vrot.slane %v901, 4
    %v904 = vor.u32 %v903, %v899
    %v905 = vrot.slane %v904, 4
    %v907 = vshll.u32 %v155, 16
    %v909 = vrot.slane %v907, 5
    %v910 = vsel %vm169, %v905, %v909
    %v912 = vshrl.u32 %v156, 16
    %v914 = vrot.slane %v912, 4
    %v915 = vshll.u32 %v156, 16
    %v917 = vrot.slane %v915, 5
    %v918 = vor.u32 %v914, %v917
    %v919 = vrot.slane %v918, 4
    %v921 = vshll.u32 %v157, 16
    %v923 = vrot.slane %v921, 5
    %v924 = vsel %vm169, %v919, %v923
    %v925 = vshrl.u32 %v157, 16
    %v927 = vrot.slane %v925, 4
    %v928 = vor.u32 %v927, %v923
    %v929 = vrot.slane %v928, 4
    %v931 = vshll.u32 %v158, 16
    %v933 = vrot.slane %v931, 5
    %v934 = vsel %vm169, %v929, %v933
    %s935 = scalar_lea.vmem [#allocation2], 20
    %v936 = vld [vmem:[%s935] sm:$0xf]
    %v937 = vld [vmem:[%s935 + $0x4] sm:$0xf]
    %v938 = vld [vmem:[%s935 + $0x8] sm:$0xf]
    %v939 = vld [vmem:[%s935 + $0xc] sm:$0xf]
    %v940 = vld [vmem:[%s935 + $0x10] sm:$0xf]
    %v941 = vunpack.c.l.b16 %v900
    %v942 = vunpack.c.l.b16 %v910
    %v943 = vunpack.c.l.b16 %v924
    %v944 = vunpack.c.l.b16 %v934
    %v945 = vpack.c.b16 %v942, %v941
    %v946 = vpack.c.b16 %v944, %v943
    %v952 = vunpack.c.l.b16 %v936
    %v953 = vunpack.c.l.b16 %v937
    %v954 = vunpack.c.l.b16 %v938
    %v955 = vunpack.c.l.b16 %v939
    %v956 = vunpack.c.l.b16 %v940
    %v957 = vpack.c.b16 %v953, %v952
    %v958 = vpack.c.b16 %v955, %v954
    %v959 = vpack.c.b16 %v956, %v956
    %vm962 = vcmask 326656
    %v964 = vsel %vm962, %v945, 0
    %v967 = vsel %vm962, %v946, 0
    %vm969 = vcmask 1043456
    %v971 = vsel %vm969, %v959, 0
    %973 = vmatprep.subr.bf16.mxu0 0
    %974 = vmatpush1.bf16.msra.mxu0 %v957
    %975 = vmatprep.subr.bf16.mxu0 0
    %976 = vmatpush1.bf16.msra.mxu0 %v958
    %977 = vmatprep.subr.bf16.mxu0 0
    %978 = vmatpush1.bf16.msra.mxu0 %v971
    %979 = vmatprep.subr.bf16.mxu0 0
    %980 = vmatpush1.bf16.msra.mxu0 0
    %981 = vmatprep.subr.bf16.mxu0 0
    %982 = vmatpush1.bf16.msra.mxu0 0
    %983 = vmatprep.subr.bf16.mxu0 0
    %984 = vmatpush1.bf16.msra.mxu0 0
    %985 = vmatprep.subr.bf16.mxu0 0
    %986 = vmatpush1.bf16.msra.mxu0 0
    %987 = vmatprep.subr.bf16.mxu0 0
    %988 = vmatpush1.bf16.msra.mxu0 0
    %989 = vmatprep.subr.bf16.mxu0 0
    %990 = vmatpush1.bf16.msra.mxu0 0
    %991 = vmatprep.subr.bf16.mxu0 0
    %992 = vmatpush1.bf16.msra.mxu0 0
    %993 = vmatprep.subr.bf16.mxu0 0
    %994 = vmatpush1.bf16.msra.mxu0 0
    %995 = vmatprep.subr.bf16.mxu0 0
    %996 = vmatpush1.bf16.msra.mxu0 0
    %997 = vmatprep.subr.bf16.mxu0 0
    %998 = vmatpush1.bf16.msra.mxu0 0
    %999 = vmatprep.subr.bf16.mxu0 0
    %1000 = vmatpush1.bf16.msra.mxu0 0
    %1001 = vmatprep.subr.bf16.mxu0 0
    %1002 = vmatpush1.bf16.msra.mxu0 0
    %1003 = vmatprep.subr.bf16.mxu0 0
    %1004 = vmatpush1.bf16.msra.mxu0 0
    %1005 = vmatprep.mubr.bf16.mxu0 0
    %1006 = vmatmul.mubr.bf16.gmra.mrb[0].mxu0 %v964
    %v1007 = vpop.f32.mrb[0].mxu0
    %v1008 = vadd.f32 0.0, %v1007
    %v1009 = vpop.f32.mrb[0].mxu0
    %v1010 = vpop.f32.mrb[0].mxu0
    %v1011 = vadd.f32 0.0, %v1010
    %v1012 = vpop.f32.mrb[0].mxu0
    %1013 = vmatprep.mubr.bf16.mxu0 0
    %1014 = vmatmul.mubr.bf16.gmra.mrb[0].mxu0 %v967
    %v1015 = vpop.f32.mrb[0].mxu0
    %v1016 = vadd.f32 0.0, %v1015
    %v1017 = vpop.f32.mrb[0].mxu0
    %v1018 = vpop.f32.mrb[0].mxu0
    %v1019 = vadd.f32 0.0, %v1018
    %v1020 = vpop.f32.mrb[0].mxu0
    %1021 = vdwg.mxu0
    %v1026 = vunpack.c.l.b16 %v153
    %v1027 = vunpack.c.l.b16 %v154
    %v1028 = vunpack.c.l.b16 %v156
    %v1029 = vunpack.c.l.b16 %v157
    %v1030 = vpack.c.b16 %v1027, %v1026
    %v1031 = vpack.c.b16 %v1029, %v1028
    %v1037 = vunpack.c.l.b16 %v882
    %v1038 = vunpack.c.l.b16 %v883
    %v1039 = vunpack.c.l.b16 %v884
    %v1040 = vunpack.c.l.b16 %v885
    %v1041 = vunpack.c.l.b16 %v886
    %v1042 = vpack.c.b16 %v1038, %v1037
    %v1043 = vpack.c.b16 %v1040, %v1039
    %v1044 = vpack.c.b16 %v1041, %v1041
    %v1048 = vsel %vm962, %v1030, 0
    %v1051 = vsel %vm962, %v1031, 0
    %v1054 = vsel %vm969, %v1044, 0
    %1056 = vmatprep.subr.bf16.mxu0 0
    %1057 = vmatpush1.bf16.msra.mxu0 %v1042
    %1058 = vmatprep.subr.bf16.mxu0 0
    %1059 = vmatpush1.bf16.msra.mxu0 %v1043
    %1060 = vmatprep.subr.bf16.mxu0 0
    %1061 = vmatpush1.bf16.msra.mxu0 %v1054
    %1062 = vmatprep.subr.bf16.mxu0 0
    %1063 = vmatpush1.bf16.msra.mxu0 0
    %1064 = vmatprep.subr.bf16.mxu0 0
    %1065 = vmatpush1.bf16.msra.mxu0 0
    %1066 = vmatprep.subr.bf16.mxu0 0
    %1067 = vmatpush1.bf16.msra.mxu0 0
    %1068 = vmatprep.subr.bf16.mxu0 0
    %1069 = vmatpush1.bf16.msra.mxu0 0
    %1070 = vmatprep.subr.bf16.mxu0 0
    %1071 = vmatpush1.bf16.msra.mxu0 0
    %1072 = vmatprep.subr.bf16.mxu0 0
    %1073 = vmatpush1.bf16.msra.mxu0 0
    %1074 = vmatprep.subr.bf16.mxu0 0
    %1075 = vmatpush1.bf16.msra.mxu0 0
    %1076 = vmatprep.subr.bf16.mxu0 0
    %1077 = vmatpush1.bf16.msra.mxu0 0
    %1078 = vmatprep.subr.bf16.mxu0 0
    %1079 = vmatpush1.bf16.msra.mxu0 0
    %1080 = vmatprep.subr.bf16.mxu0 0
    %1081 = vmatpush1.bf16.msra.mxu0 0
    %1082 = vmatprep.subr.bf16.mxu0 0
    %1083 = vmatpush1.bf16.msra.mxu0 0
    %1084 = vmatprep.subr.bf16.mxu0 0
    %1085 = vmatpush1.bf16.msra.mxu0 0
    %1086 = vmatprep.subr.bf16.mxu0 0
    %1087 = vmatpush1.bf16.msra.mxu0 0
    %1088 = vmatprep.mubr.bf16.mxu0 0
    %1089 = vmatmul.mubr.bf16.gmra.mrb[0].mxu0 %v1048
    %v1090 = vpop.f32.mrb[0].mxu0
    %v1091 = vadd.f32 %v1008, %v1090
    %v1092 = vpop.f32.mrb[0].mxu0
    %v1093 = vpop.f32.mrb[0].mxu0
    %v1094 = vadd.f32 %v1011, %v1093
    %v1095 = vpop.f32.mrb[0].mxu0
    %1096 = vmatprep.mubr.bf16.mxu0 0
    %1097 = vmatmul.mubr.bf16.gmra.mrb[0].mxu0 %v1051
    %v1098 = vpop.f32.mrb[0].mxu0
    %v1099 = vadd.f32 %v1016, %v1098
    %v1100 = vpop.f32.mrb[0].mxu0
    %v1101 = vpop.f32.mrb[0].mxu0
    %v1102 = vadd.f32 %v1019, %v1101
    %v1103 = vpop.f32.mrb[0].mxu0
    %1104 = vdwg.mxu0
    %v1107 = vrot.slane %v153, 5
    %v1108 = vrot.slane %v1107, 4
    %v1109 = vrot.slane %v154, 5
    %v1110 = vsel %vm328, %v1108, %v1109
    %v1111 = vrot.slane %v1109, 4
    %v1112 = vrot.slane %v155, 5
    %v1113 = vsel %vm328, %v1111, %v1112
    %v1114 = vrot.slane %v156, 5
    %v1115 = vrot.slane %v1114, 4
    %v1116 = vrot.slane %v157, 5
    %v1117 = vsel %vm328, %v1115, %v1116
    %v1118 = vrot.slane %v1116, 4
    %v1119 = vrot.slane %v158, 5
    %v1120 = vsel %vm328, %v1118, %v1119
    %s1121 = scalar_lea.vmem [#allocation2], 40
    %v1122 = vld [vmem:[%s1121] sm:$0xf]
    %v1123 = vld [vmem:[%s1121 + $0x4] sm:$0xf]
    %v1124 = vld [vmem:[%s1121 + $0x8] sm:$0xf]
    %v1125 = vld [vmem:[%s1121 + $0xc] sm:$0xf]
    %v1126 = vld [vmem:[%s1121 + $0x10] sm:$0xf]
    %v1127 = vunpack.c.l.b16 %v1110
    %v1128 = vunpack.c.l.b16 %v1113
    %v1129 = vunpack.c.l.b16 %v1117
    %v1130 = vunpack.c.l.b16 %v1120
    %v1131 = vpack.c.b16 %v1128, %v1127
    %v1132 = vpack.c.b16 %v1130, %v1129
    %v1138 = vunpack.c.l.b16 %v1122
    %v1139 = vunpack.c.l.b16 %v1123
    %v1140 = vunpack.c.l.b16 %v1124
    %v1141 = vunpack.c.l.b16 %v1125
    %v1142 = vunpack.c.l.b16 %v1126
    %v1143 = vpack.c.b16 %v1139, %v1138
    %v1144 = vpack.c.b16 %v1141, %v1140
    %v1145 = vpack.c.b16 %v1142, %v1142
    %v1149 = vsel %vm962, %v1131, 0
    %v1152 = vsel %vm962, %v1132, 0
    %v1155 = vsel %vm969, %v1145, 0
    %1157 = vmatprep.subr.bf16.mxu0 0
    %1158 = vmatpush1.bf16.msra.mxu0 %v1143
    %1159 = vmatprep.subr.bf16.mxu0 0
    %1160 = vmatpush1.bf16.msra.mxu0 %v1144
    %1161 = vmatprep.subr.bf16.mxu0 0
    %1162 = vmatpush1.bf16.msra.mxu0 %v1155
    %1163 = vmatprep.subr.bf16.mxu0 0
    %1164 = vmatpush1.bf16.msra.mxu0 0
    %1165 = vmatprep.subr.bf16.mxu0 0
    %1166 = vmatpush1.bf16.msra.mxu0 0
    %1167 = vmatprep.subr.bf16.mxu0 0
    %1168 = vmatpush1.bf16.msra.mxu0 0
    %1169 = vmatprep.subr.bf16.mxu0 0
    %1170 = vmatpush1.bf16.msra.mxu0 0
    %1171 = vmatprep.subr.bf16.mxu0 0
    %1172 = vmatpush1.bf16.msra.mxu0 0
    %1173 = vmatprep.subr.bf16.mxu0 0
    %1174 = vmatpush1.bf16.msra.mxu0 0
    %1175 = vmatprep.subr.bf16.mxu0 0
    %1176 = vmatpush1.bf16.msra.mxu0 0
    %1177 = vmatprep.subr.bf16.mxu0 0
    %1178 = vmatpush1.bf16.msra.mxu0 0
    %1179 = vmatprep.subr.bf16.mxu0 0
    %1180 = vmatpush1.bf16.msra.mxu0 0
    %1181 = vmatprep.subr.bf16.mxu0 0
    %1182 = vmatpush1.bf16.msra.mxu0 0
    %1183 = vmatprep.subr.bf16.mxu0 0
    %1184 = vmatpush1.bf16.msra.mxu0 0
    %1185 = vmatprep.subr.bf16.mxu0 0
    %1186 = vmatpush1.bf16.msra.mxu0 0
    %1187 = vmatprep.subr.bf16.mxu0 0
    %1188 = vmatpush1.bf16.msra.mxu0 0
    %1189 = vmatprep.mubr.bf16.mxu0 0
    %1190 = vmatmul.mubr.bf16.gmra.mrb[0].mxu0 %v1149
    %v1191 = vpop.f32.mrb[0].mxu0
    %v1192 = vadd.f32 0.0, %v1191
    %v1193 = vpop.f32.mrb[0].mxu0
    %v1194 = vpop.f32.mrb[0].mxu0
    %v1195 = vadd.f32 0.0, %v1194
    %v1196 = vpop.f32.mrb[0].mxu0
    %1197 = vmatprep.mubr.bf16.mxu0 0
    %1198 = vmatmul.mubr.bf16.gmra.mrb[0].mxu0 %v1152
    %v1199 = vpop.f32.mrb[0].mxu0
    %v1200 = vadd.f32 0.0, %v1199
    %v1201 = vpop.f32.mrb[0].mxu0
    %v1202 = vpop.f32.mrb[0].mxu0
    %v1203 = vadd.f32 0.0, %v1202
    %v1204 = vpop.f32.mrb[0].mxu0
    %1205 = vdwg.mxu0
    %v1206 = vadd.f32 %v1091, %v1192
    %v1207 = vadd.f32 %v1094, %v1195
    %v1208 = vadd.f32 %v1099, %v1200
    %v1209 = vadd.f32 %v1102, %v1203
    %v1210 = vrot.slane %v888, 5
    %v1211 = vrot.slane %v891, 6
    %v1212 = vor.u32 %v1210, %v1211
    %v1213 = vrot.slane %v1212, 4
    %v1214 = vrot.slane %v901, 5
    %v1215 = vrot.slane %v897, 6
    %v1216 = vor.u32 %v1214, %v1215
    %v1217 = vsel %vm405, %v1213, %v1216
    %v1218 = vrot.slane %v1216, 4
    %v1219 = vshrl.u32 %v155, 16
    %v1221 = vrot.slane %v1219, 5
    %v1222 = vrot.slane %v907, 6
    %v1223 = vor.u32 %v1221, %v1222
    %v1224 = vsel %vm405, %v1218, %v1223
    %v1225 = vrot.slane %v912, 5
    %v1226 = vrot.slane %v915, 6
    %v1227 = vor.u32 %v1225, %v1226
    %v1228 = vrot.slane %v1227, 4
    %v1229 = vrot.slane %v925, 5
    %v1230 = vrot.slane %v921, 6
    %v1231 = vor.u32 %v1229, %v1230
    %v1232 = vsel %vm405, %v1228, %v1231
    %v1233 = vrot.slane %v1231, 4
    %v1234 = vshrl.u32 %v158, 16
    %v1236 = vrot.slane %v1234, 5
    %v1237 = vrot.slane %v931, 6
    %v1238 = vor.u32 %v1236, %v1237
    %v1239 = vsel %vm405, %v1233, %v1238
    %s1240 = scalar_lea.vmem [#allocation2], 60
    %v1241 = vld [vmem:[%s1240] sm:$0xf]
    %v1242 = vld [vmem:[%s1240 + $0x4] sm:$0xf]
    %v1243 = vld [vmem:[%s1240 + $0x8] sm:$0xf]
    %v1244 = vld [vmem:[%s1240 + $0xc] sm:$0xf]
    %v1245 = vld [vmem:[%s1240 + $0x10] sm:$0xf]
    %v1246 = vunpack.c.l.b16 %v1217
    %v1247 = vunpack.c.l.b16 %v1224
    %v1248 = vunpack.c.l.b16 %v1232
    %v1249 = vunpack.c.l.b16 %v1239
    %v1250 = vpack.c.b16 %v1247, %v1246
    %v1251 = vpack.c.b16 %v1249, %v1248
    %v1257 = vunpack.c.l.b16 %v1241
    %v1258 = vunpack.c.l.b16 %v1242
    %v1259 = vunpack.c.l.b16 %v1243
    %v1260 = vunpack.c.l.b16 %v1244
    %v1261 = vunpack.c.l.b16 %v1245
    %v1262 = vpack.c.b16 %v1258, %v1257
    %v1263 = vpack.c.b16 %v1260, %v1259
    %v1264 = vpack.c.b16 %v1261, %v1261
    %v1268 = vsel %vm962, %v1250, 0
    %v1271 = vsel %vm962, %v1251, 0
    %v1274 = vsel %vm969, %v1264, 0
    %1276 = vmatprep.subr.bf16.mxu0 0
    %1277 = vmatpush1.bf16.msra.mxu0 %v1262
    %1278 = vmatprep.subr.bf16.mxu0 0
    %1279 = vmatpush1.bf16.msra.mxu0 %v1263
    %1280 = vmatprep.subr.bf16.mxu0 0
    %1281 = vmatpush1.bf16.msra.mxu0 %v1274
    %1282 = vmatprep.subr.bf16.mxu0 0
    %1283 = vmatpush1.bf16.msra.mxu0 0
    %1284 = vmatprep.subr.bf16.mxu0 0
    %1285 = vmatpush1.bf16.msra.mxu0 0
    %1286 = vmatprep.subr.bf16.mxu0 0
    %1287 = vmatpush1.bf16.msra.mxu0 0
    %1288 = vmatprep.subr.bf16.mxu0 0
    %1289 = vmatpush1.bf16.msra.mxu0 0
    %1290 = vmatprep.subr.bf16.mxu0 0
    %1291 = vmatpush1.bf16.msra.mxu0 0
    %1292 = vmatprep.subr.bf16.mxu0 0
    %1293 = vmatpush1.bf16.msra.mxu0 0
    %1294 = vmatprep.subr.bf16.mxu0 0
    %1295 = vmatpush1.bf16.msra.mxu0 0
    %1296 = vmatprep.subr.bf16.mxu0 0
    %1297 = vmatpush1.bf16.msra.mxu0 0
    %1298 = vmatprep.subr.bf16.mxu0 0
    %1299 = vmatpush1.bf16.msra.mxu0 0
    %1300 = vmatprep.subr.bf16.mxu0 0
    %1301 = vmatpush1.bf16.msra.mxu0 0
    %1302 = vmatprep.subr.bf16.mxu0 0
    %1303 = vmatpush1.bf16.msra.mxu0 0
    %1304 = vmatprep.subr.bf16.mxu0 0
    %1305 = vmatpush1.bf16.msra.mxu0 0
    %1306 = vmatprep.subr.bf16.mxu0 0
    %1307 = vmatpush1.bf16.msra.mxu0 0
    %1308 = vmatprep.mubr.bf16.mxu0 0
    %1309 = vmatmul.mubr.bf16.gmra.mrb[0].mxu0 %v1268
    %v1310 = vpop.f32.mrb[0].mxu0
    %v1311 = vadd.f32 0.0, %v1310
    %v1312 = vpop.f32.mrb[0].mxu0
    %v1313 = vpop.f32.mrb[0].mxu0
    %v1314 = vadd.f32 0.0, %v1313
    %v1315 = vpop.f32.mrb[0].mxu0
    %1316 = vmatprep.mubr.bf16.mxu0 0
    %1317 = vmatmul.mubr.bf16.gmra.mrb[0].mxu0 %v1271
    %v1318 = vpop.f32.mrb[0].mxu0
    %v1319 = vadd.f32 0.0, %v1318
    %v1320 = vpop.f32.mrb[0].mxu0
    %v1321 = vpop.f32.mrb[0].mxu0
    %v1322 = vadd.f32 0.0, %v1321
    %v1323 = vpop.f32.mrb[0].mxu0
    %1324 = vdwg.mxu0
    %v1325 = vadd.f32 %v1206, %v1311
    %v1326 = vadd.f32 %v1207, %v1314
    %v1327 = vadd.f32 %v1208, %v1319
    %v1328 = vadd.f32 %v1209, %v1322
    %v1329 = vrot.slane %v153, 6
    %v1330 = vrot.slane %v1329, 4
    %v1331 = vrot.slane %v154, 6
    %v1332 = vsel %vm494, %v1330, %v1331
    %v1333 = vrot.slane %v1331, 4
    %v1334 = vrot.slane %v155, 6
    %v1335 = vsel %vm494, %v1333, %v1334
    %v1336 = vrot.slane %v156, 6
    %v1337 = vrot.slane %v1336, 4
    %v1338 = vrot.slane %v157, 6
    %v1339 = vsel %vm494, %v1337, %v1338
    %v1340 = vrot.slane %v1338, 4
    %v1341 = vrot.slane %v158, 6
    %v1342 = vsel %vm494, %v1340, %v1341
    %s1343 = scalar_lea.vmem [#allocation2], 80
    %v1344 = vld [vmem:[%s1343] sm:$0xf]
    %v1345 = vld [vmem:[%s1343 + $0x4] sm:$0xf]
    %v1346 = vld [vmem:[%s1343 + $0x8] sm:$0xf]
    %v1347 = vld [vmem:[%s1343 + $0xc] sm:$0xf]
    %v1348 = vld [vmem:[%s1343 + $0x10] sm:$0xf]
    %v1349 = vunpack.c.l.b16 %v1332
    %v1350 = vunpack.c.l.b16 %v1335
    %v1351 = vunpack.c.l.b16 %v1339
    %v1352 = vunpack.c.l.b16 %v1342
    %v1353 = vpack.c.b16 %v1350, %v1349
    %v1354 = vpack.c.b16 %v1352, %v1351
    %v1360 = vunpack.c.l.b16 %v1344
    %v1361 = vunpack.c.l.b16 %v1345
    %v1362 = vunpack.c.l.b16 %v1346
    %v1363 = vunpack.c.l.b16 %v1347
    %v1364 = vunpack.c.l.b16 %v1348
    %v1365 = vpack.c.b16 %v1361, %v1360
    %v1366 = vpack.c.b16 %v1363, %v1362
    %v1367 = vpack.c.b16 %v1364, %v1364
    %v1371 = vsel %vm962, %v1353, 0
    %v1374 = vsel %vm962, %v1354, 0
    %v1377 = vsel %vm969, %v1367, 0
    %1379 = vmatprep.subr.bf16.mxu0 0
    %1380 = vmatpush1.bf16.msra.mxu0 %v1365
    %1381 = vmatprep.subr.bf16.mxu0 0
    %1382 = vmatpush1.bf16.msra.mxu0 %v1366
    %1383 = vmatprep.subr.bf16.mxu0 0
    %1384 = vmatpush1.bf16.msra.mxu0 %v1377
    %1385 = vmatprep.subr.bf16.mxu0 0
    %1386 = vmatpush1.bf16.msra.mxu0 0
    %1387 = vmatprep.subr.bf16.mxu0 0
    %1388 = vmatpush1.bf16.msra.mxu0 0
    %1389 = vmatprep.subr.bf16.mxu0 0
    %1390 = vmatpush1.bf16.msra.mxu0 0
    %1391 = vmatprep.subr.bf16.mxu0 0
    %1392 = vmatpush1.bf16.msra.mxu0 0
    %1393 = vmatprep.subr.bf16.mxu0 0
    %1394 = vmatpush1.bf16.msra.mxu0 0
    %1395 = vmatprep.subr.bf16.mxu0 0
    %1396 = vmatpush1.bf16.msra.mxu0 0
    %1397 = vmatprep.subr.bf16.mxu0 0
    %1398 = vmatpush1.bf16.msra.mxu0 0
    %1399 = vmatprep.subr.bf16.mxu0 0
    %1400 = vmatpush1.bf16.msra.mxu0 0
    %1401 = vmatprep.subr.bf16.mxu0 0
    %1402 = vmatpush1.bf16.msra.mxu0 0
    %1403 = vmatprep.subr.bf16.mxu0 0
    %1404 = vmatpush1.bf16.msra.mxu0 0
    %1405 = vmatprep.subr.bf16.mxu0 0
    %1406 = vmatpush1.bf16.msra.mxu0 0
    %1407 = vmatprep.subr.bf16.mxu0 0
    %1408 = vmatpush1.bf16.msra.mxu0 0
    %1409 = vmatprep.subr.bf16.mxu0 0
    %1410 = vmatpush1.bf16.msra.mxu0 0
    %1411 = vmatprep.mubr.bf16.mxu0 0
    %1412 = vmatmul.mubr.bf16.gmra.mrb[0].mxu0 %v1371
    %v1413 = vpop.f32.mrb[0].mxu0
    %v1414 = vadd.f32 0.0, %v1413
    %v1415 = vpop.f32.mrb[0].mxu0
    %v1416 = vpop.f32.mrb[0].mxu0
    %v1417 = vadd.f32 0.0, %v1416
    %v1418 = vpop.f32.mrb[0].mxu0
    %1419 = vmatprep.mubr.bf16.mxu0 0
    %1420 = vmatmul.mubr.bf16.gmra.mrb[0].mxu0 %v1374
    %v1421 = vpop.f32.mrb[0].mxu0
    %v1422 = vadd.f32 0.0, %v1421
    %v1423 = vpop.f32.mrb[0].mxu0
    %v1424 = vpop.f32.mrb[0].mxu0
    %v1425 = vadd.f32 0.0, %v1424
    %v1426 = vpop.f32.mrb[0].mxu0
    %1427 = vdwg.mxu0
    %v1428 = vadd.f32 %v1325, %v1414
    %v1429 = vadd.f32 %v1326, %v1417
    %v1430 = vadd.f32 %v1327, %v1422
    %v1431 = vadd.f32 %v1328, %v1425
    %v1432 = vld [vmem:[%s3] sm:$0x1]
    %v1434 = vlaneseq
    %v1435 = vshrl.u32 %v1434, 7
    %v1436 = vsub.s32 0, %v1435
    %v1437 = vrot.slane %v1432, %v1436
    %v1439 = vadd.f32 %v1428, %v1437
    %v1440 = vadd.f32 %v1429, %v1437
    %v1441 = vadd.f32 %v1430, %v1437
    %v1442 = vadd.f32 %v1431, %v1437
    %v1443 = vld [vmem:[#allocation5] sm:$0xf]
    %v1444 = vld [vmem:[#allocation5 + $0x4] sm:$0xf]
    %v1445 = vld [vmem:[#allocation5 + $0x8] sm:$0xf]
    %v1446 = vld [vmem:[#allocation5 + $0xc] sm:$0xf]
    %v1447 = vld [vmem:[#allocation5 + $0x10] sm:$0xf]
    %s1448 = scalar_lea.vmem [#allocation5], 20
    %v1449 = vld [vmem:[%s1448] sm:$0xf]
    %v1450 = vld [vmem:[%s1448 + $0x4] sm:$0xf]
    %v1451 = vld [vmem:[%s1448 + $0x8] sm:$0xf]
    %v1452 = vld [vmem:[%s1448 + $0xc] sm:$0xf]
    %v1453 = vld [vmem:[%s1448 + $0x10] sm:$0xf]
    %v1459 = vunpack.c.l.b16 %v1449
    %v1460 = vunpack.c.l.b16 %v1450
    %v1461 = vunpack.c.l.b16 %v1451
    %v1462 = vunpack.c.l.b16 %v1452
    %v1463 = vunpack.c.l.b16 %v1453
    %v1464 = vpack.c.b16 %v1460, %v1459
    %v1465 = vpack.c.b16 %v1462, %v1461
    %v1466 = vpack.c.b16 %v1463, %v1463
    %v1470 = vsel %vm969, %v1466, 0
    %1472 = vmatprep.subr.bf16.mxu0 0
    %1473 = vmatpush1.bf16.msra.mxu0 %v1464
    %1474 = vmatprep.subr.bf16.mxu0 0
    %1475 = vmatpush1.bf16.msra.mxu0 %v1465
    %1476 = vmatprep.subr.bf16.mxu0 0
    %1477 = vmatpush1.bf16.msra.mxu0 %v1470
    %1478 = vmatprep.subr.bf16.mxu0 0
    %1479 = vmatpush1.bf16.msra.mxu0 0
    %1480 = vmatprep.subr.bf16.mxu0 0
    %1481 = vmatpush1.bf16.msra.mxu0 0
    %1482 = vmatprep.subr.bf16.mxu0 0
    %1483 = vmatpush1.bf16.msra.mxu0 0
    %1484 = vmatprep.subr.bf16.mxu0 0
    %1485 = vmatpush1.bf16.msra.mxu0 0
    %1486 = vmatprep.subr.bf16.mxu0 0
    %1487 = vmatpush1.bf16.msra.mxu0 0
    %1488 = vmatprep.subr.bf16.mxu0 0
    %1489 = vmatpush1.bf16.msra.mxu0 0
    %1490 = vmatprep.subr.bf16.mxu0 0
    %1491 = vmatpush1.bf16.msra.mxu0 0
    %1492 = vmatprep.subr.bf16.mxu0 0
    %1493 = vmatpush1.bf16.msra.mxu0 0
    %1494 = vmatprep.subr.bf16.mxu0 0
    %1495 = vmatpush1.bf16.msra.mxu0 0
    %1496 = vmatprep.subr.bf16.mxu0 0
    %1497 = vmatpush1.bf16.msra.mxu0 0
    %1498 = vmatprep.subr.bf16.mxu0 0
    %1499 = vmatpush1.bf16.msra.mxu0 0
    %1500 = vmatprep.subr.bf16.mxu0 0
    %1501 = vmatpush1.bf16.msra.mxu0 0
    %1502 = vmatprep.subr.bf16.mxu0 0
    %1503 = vmatpush1.bf16.msra.mxu0 0
    %1504 = vmatprep.mubr.bf16.mxu0 0
    %1505 = vmatmul.mubr.bf16.gmra.mrb[0].mxu0 %v964
    %v1506 = vpop.f32.mrb[0].mxu0
    %v1507 = vadd.f32 0.0, %v1506
    %v1508 = vpop.f32.mrb[0].mxu0
    %v1509 = vpop.f32.mrb[0].mxu0
    %v1510 = vadd.f32 0.0, %v1509
    %v1511 = vpop.f32.mrb[0].mxu0
    %1512 = vmatprep.mubr.bf16.mxu0 0
    %1513 = vmatmul.mubr.bf16.gmra.mrb[0].mxu0 %v967
    %v1514 = vpop.f32.mrb[0].mxu0
    %v1515 = vadd.f32 0.0, %v1514
    %v1516 = vpop.f32.mrb[0].mxu0
    %v1517 = vpop.f32.mrb[0].mxu0
    %v1518 = vadd.f32 0.0, %v1517
    %v1519 = vpop.f32.mrb[0].mxu0
    %1520 = vdwg.mxu0
    %v1526 = vunpack.c.l.b16 %v1443
    %v1527 = vunpack.c.l.b16 %v1444
    %v1528 = vunpack.c.l.b16 %v1445
    %v1529 = vunpack.c.l.b16 %v1446
    %v1530 = vunpack.c.l.b16 %v1447
    %v1531 = vpack.c.b16 %v1527, %v1526
    %v1532 = vpack.c.b16 %v1529, %v1528
    %v1533 = vpack.c.b16 %v1530, %v1530
    %v1537 = vsel %vm969, %v1533, 0
    %1539 = vmatprep.subr.bf16.mxu0 0
    %1540 = vmatpush1.bf16.msra.mxu0 %v1531
    %1541 = vmatprep.subr.bf16.mxu0 0
    %1542 = vmatpush1.bf16.msra.mxu0 %v1532
    %1543 = vmatprep.subr.bf16.mxu0 0
    %1544 = vmatpush1.bf16.msra.mxu0 %v1537
    %1545 = vmatprep.subr.bf16.mxu0 0
    %1546 = vmatpush1.bf16.msra.mxu0 0
    %1547 = vmatprep.subr.bf16.mxu0 0
    %1548 = vmatpush1.bf16.msra.mxu0 0
    %1549 = vmatprep.subr.bf16.mxu0 0
    %1550 = vmatpush1.bf16.msra.mxu0 0
    %1551 = vmatprep.subr.bf16.mxu0 0
    %1552 = vmatpush1.bf16.msra.mxu0 0
    %1553 = vmatprep.subr.bf16.mxu0 0
    %1554 = vmatpush1.bf16.msra.mxu0 0
    %1555 = vmatprep.subr.bf16.mxu0 0
    %1556 = vmatpush1.bf16.msra.mxu0 0
    %1557 = vmatprep.subr.bf16.mxu0 0
    %1558 = vmatpush1.bf16.msra.mxu0 0
    %1559 = vmatprep.subr.bf16.mxu0 0
    %1560 = vmatpush1.bf16.msra.mxu0 0
    %1561 = vmatprep.subr.bf16.mxu0 0
    %1562 = vmatpush1.bf16.msra.mxu0 0
    %1563 = vmatprep.subr.bf16.mxu0 0
    %1564 = vmatpush1.bf16.msra.mxu0 0
    %1565 = vmatprep.subr.bf16.mxu0 0
    %1566 = vmatpush1.bf16.msra.mxu0 0
    %1567 = vmatprep.subr.bf16.mxu0 0
    %1568 = vmatpush1.bf16.msra.mxu0 0
    %1569 = vmatprep.subr.bf16.mxu0 0
    %1570 = vmatpush1.bf16.msra.mxu0 0
    %1571 = vmatprep.mubr.bf16.mxu0 0
    %1572 = vmatmul.mubr.bf16.gmra.mrb[0].mxu0 %v1048
    %v1573 = vpop.f32.mrb[0].mxu0
    %v1574 = vadd.f32 %v1507, %v1573
    %v1575 = vpop.f32.mrb[0].mxu0
    %v1576 = vpop.f32.mrb[0].mxu0
    %v1577 = vadd.f32 %v1510, %v1576
    %v1578 = vpop.f32.mrb[0].mxu0
    %1579 = vmatprep.mubr.bf16.mxu0 0
    %1580 = vmatmul.mubr.bf16.gmra.mrb[0].mxu0 %v1051
    %v1581 = vpop.f32.mrb[0].mxu0
    %v1582 = vadd.f32 %v1515, %v1581
    %v1583 = vpop.f32.mrb[0].mxu0
    %v1584 = vpop.f32.mrb[0].mxu0
    %v1585 = vadd.f32 %v1518, %v1584
    %v1586 = vpop.f32.mrb[0].mxu0
    %1587 = vdwg.mxu0
    %s1588 = scalar_lea.vmem [#allocation5], 40
    %v1589 = vld [vmem:[%s1588] sm:$0xf]
    %v1590 = vld [vmem:[%s1588 + $0x4] sm:$0xf]
    %v1591 = vld [vmem:[%s1588 + $0x8] sm:$0xf]
    %v1592 = vld [vmem:[%s1588 + $0xc] sm:$0xf]
    %v1593 = vld [vmem:[%s1588 + $0x10] sm:$0xf]
    %v1599 = vunpack.c.l.b16 %v1589
    %v1600 = vunpack.c.l.b16 %v1590
    %v1601 = vunpack.c.l.b16 %v1591
    %v1602 = vunpack.c.l.b16 %v1592
    %v1603 = vunpack.c.l.b16 %v1593
    %v1604 = vpack.c.b16 %v1600, %v1599
    %v1605 = vpack.c.b16 %v1602, %v1601
    %v1606 = vpack.c.b16 %v1603, %v1603
    %v1610 = vsel %vm969, %v1606, 0
    %1612 = vmatprep.subr.bf16.mxu0 0
    %1613 = vmatpush1.bf16.msra.mxu0 %v1604
    %1614 = vmatprep.subr.bf16.mxu0 0
    %1615 = vmatpush1.bf16.msra.mxu0 %v1605
    %1616 = vmatprep.subr.bf16.mxu0 0
    %1617 = vmatpush1.bf16.msra.mxu0 %v1610
    %1618 = vmatprep.subr.bf16.mxu0 0
    %1619 = vmatpush1.bf16.msra.mxu0 0
    %1620 = vmatprep.subr.bf16.mxu0 0
    %1621 = vmatpush1.bf16.msra.mxu0 0
    %1622 = vmatprep.subr.bf16.mxu0 0
    %1623 = vmatpush1.bf16.msra.mxu0 0
    %1624 = vmatprep.subr.bf16.mxu0 0
    %1625 = vmatpush1.bf16.msra.mxu0 0
    %1626 = vmatprep.subr.bf16.mxu0 0
    %1627 = vmatpush1.bf16.msra.mxu0 0
    %1628 = vmatprep.subr.bf16.mxu0 0
    %1629 = vmatpush1.bf16.msra.mxu0 0
    %1630 = vmatprep.subr.bf16.mxu0 0
    %1631 = vmatpush1.bf16.msra.mxu0 0
    %1632 = vmatprep.subr.bf16.mxu0 0
    %1633 = vmatpush1.bf16.msra.mxu0 0
    %1634 = vmatprep.subr.bf16.mxu0 0
    %1635 = vmatpush1.bf16.msra.mxu0 0
    %1636 = vmatprep.subr.bf16.mxu0 0
    %1637 = vmatpush1.bf16.msra.mxu0 0
    %1638 = vmatprep.subr.bf16.mxu0 0
    %1639 = vmatpush1.bf16.msra.mxu0 0
    %1640 = vmatprep.subr.bf16.mxu0 0
    %1641 = vmatpush1.bf16.msra.mxu0 0
    %1642 = vmatprep.subr.bf16.mxu0 0
    %1643 = vmatpush1.bf16.msra.mxu0 0
    %1644 = vmatprep.mubr.bf16.mxu0 0
    %1645 = vmatmul.mubr.bf16.gmra.mrb[0].mxu0 %v1149
    %v1646 = vpop.f32.mrb[0].mxu0
    %v1647 = vadd.f32 0.0, %v1646
    %v1648 = vpop.f32.mrb[0].mxu0
    %v1649 = vpop.f32.mrb[0].mxu0
    %v1650 = vadd.f32 0.0, %v1649
    %v1651 = vpop.f32.mrb[0].mxu0
    %1652 = vmatprep.mubr.bf16.mxu0 0
    %1653 = vmatmul.mubr.bf16.gmra.mrb[0].mxu0 %v1152
    %v1654 = vpop.f32.mrb[0].mxu0
    %v1655 = vadd.f32 0.0, %v1654
    %v1656 = vpop.f32.mrb[0].mxu0
    %v1657 = vpop.f32.mrb[0].mxu0
    %v1658 = vadd.f32 0.0, %v1657
    %v1659 = vpop.f32.mrb[0].mxu0
    %1660 = vdwg.mxu0
    %v1661 = vadd.f32 %v1574, %v1647
    %v1662 = vadd.f32 %v1577, %v1650
    %v1663 = vadd.f32 %v1582, %v1655
    %v1664 = vadd.f32 %v1585, %v1658
    %s1665 = scalar_lea.vmem [#allocation5], 60
    %v1666 = vld [vmem:[%s1665] sm:$0xf]
    %v1667 = vld [vmem:[%s1665 + $0x4] sm:$0xf]
    %v1668 = vld [vmem:[%s1665 + $0x8] sm:$0xf]
    %v1669 = vld [vmem:[%s1665 + $0xc] sm:$0xf]
    %v1670 = vld [vmem:[%s1665 + $0x10] sm:$0xf]
    %v1676 = vunpack.c.l.b16 %v1666
    %v1677 = vunpack.c.l.b16 %v1667
    %v1678 = vunpack.c.l.b16 %v1668
    %v1679 = vunpack.c.l.b16 %v1669
    %v1680 = vunpack.c.l.b16 %v1670
    %v1681 = vpack.c.b16 %v1677, %v1676
    %v1682 = vpack.c.b16 %v1679, %v1678
    %v1683 = vpack.c.b16 %v1680, %v1680
    %v1687 = vsel %vm969, %v1683, 0
    %1689 = vmatprep.subr.bf16.mxu0 0
    %1690 = vmatpush1.bf16.msra.mxu0 %v1681
    %1691 = vmatprep.subr.bf16.mxu0 0
    %1692 = vmatpush1.bf16.msra.mxu0 %v1682
    %1693 = vmatprep.subr.bf16.mxu0 0
    %1694 = vmatpush1.bf16.msra.mxu0 %v1687
    %1695 = vmatprep.subr.bf16.mxu0 0
    %1696 = vmatpush1.bf16.msra.mxu0 0
    %1697 = vmatprep.subr.bf16.mxu0 0
    %1698 = vmatpush1.bf16.msra.mxu0 0
    %1699 = vmatprep.subr.bf16.mxu0 0
    %1700 = vmatpush1.bf16.msra.mxu0 0
    %1701 = vmatprep.subr.bf16.mxu0 0
    %1702 = vmatpush1.bf16.msra.mxu0 0
    %1703 = vmatprep.subr.bf16.mxu0 0
    %1704 = vmatpush1.bf16.msra.mxu0 0
    %1705 = vmatprep.subr.bf16.mxu0 0
    %1706 = vmatpush1.bf16.msra.mxu0 0
    %1707 = vmatprep.subr.bf16.mxu0 0
    %1708 = vmatpush1.bf16.msra.mxu0 0
    %1709 = vmatprep.subr.bf16.mxu0 0
    %1710 = vmatpush1.bf16.msra.mxu0 0
    %1711 = vmatprep.subr.bf16.mxu0 0
    %1712 = vmatpush1.bf16.msra.mxu0 0
    %1713 = vmatprep.subr.bf16.mxu0 0
    %1714 = vmatpush1.bf16.msra.mxu0 0
    %1715 = vmatprep.subr.bf16.mxu0 0
    %1716 = vmatpush1.bf16.msra.mxu0 0
    %1717 = vmatprep.subr.bf16.mxu0 0
    %1718 = vmatpush1.bf16.msra.mxu0 0
    %1719 = vmatprep.subr.bf16.mxu0 0
    %1720 = vmatpush1.bf16.msra.mxu0 0
    %1721 = vmatprep.mubr.bf16.mxu0 0
    %1722 = vmatmul.mubr.bf16.gmra.mrb[0].mxu0 %v1268
    %v1723 = vpop.f32.mrb[0].mxu0
    %v1724 = vadd.f32 0.0, %v1723
    %v1725 = vpop.f32.mrb[0].mxu0
    %v1726 = vpop.f32.mrb[0].mxu0
    %v1727 = vadd.f32 0.0, %v1726
    %v1728 = vpop.f32.mrb[0].mxu0
    %1729 = vmatprep.mubr.bf16.mxu0 0
    %1730 = vmatmul.mubr.bf16.gmra.mrb[0].mxu0 %v1271
    %v1731 = vpop.f32.mrb[0].mxu0
    %v1732 = vadd.f32 0.0, %v1731
    %v1733 = vpop.f32.mrb[0].mxu0
    %v1734 = vpop.f32.mrb[0].mxu0
    %v1735 = vadd.f32 0.0, %v1734
    %v1736 = vpop.f32.mrb[0].mxu0
    %1737 = vdwg.mxu0
    %v1738 = vadd.f32 %v1661, %v1724
    %v1739 = vadd.f32 %v1662, %v1727
    %v1740 = vadd.f32 %v1663, %v1732
    %v1741 = vadd.f32 %v1664, %v1735
    %s1742 = scalar_lea.vmem [#allocation5], 80
    %v1743 = vld [vmem:[%s1742] sm:$0xf]
    %v1744 = vld [vmem:[%s1742 + $0x4] sm:$0xf]
    %v1745 = vld [vmem:[%s1742 + $0x8] sm:$0xf]
    %v1746 = vld [vmem:[%s1742 + $0xc] sm:$0xf]
    %v1747 = vld [vmem:[%s1742 + $0x10] sm:$0xf]
    %v1753 = vunpack.c.l.b16 %v1743
    %v1754 = vunpack.c.l.b16 %v1744
    %v1755 = vunpack.c.l.b16 %v1745
    %v1756 = vunpack.c.l.b16 %v1746
    %v1757 = vunpack.c.l.b16 %v1747
    %v1758 = vpack.c.b16 %v1754, %v1753
    %v1759 = vpack.c.b16 %v1756, %v1755
    %v1760 = vpack.c.b16 %v1757, %v1757
    %v1764 = vsel %vm969, %v1760, 0
    %1766 = vmatprep.subr.bf16.mxu0 0
    %1767 = vmatpush1.bf16.msra.mxu0 %v1758
    %1768 = vmatprep.subr.bf16.mxu0 0
    %1769 = vmatpush1.bf16.msra.mxu0 %v1759
    %1770 = vmatprep.subr.bf16.mxu0 0
    %1771 = vmatpush1.bf16.msra.mxu0 %v1764
    %1772 = vmatprep.subr.bf16.mxu0 0
    %1773 = vmatpush1.bf16.msra.mxu0 0
    %1774 = vmatprep.subr.bf16.mxu0 0
    %1775 = vmatpush1.bf16.msra.mxu0 0
    %1776 = vmatprep.subr.bf16.mxu0 0
    %1777 = vmatpush1.bf16.msra.mxu0 0
    %1778 = vmatprep.subr.bf16.mxu0 0
    %1779 = vmatpush1.bf16.msra.mxu0 0
    %1780 = vmatprep.subr.bf16.mxu0 0
    %1781 = vmatpush1.bf16.msra.mxu0 0
    %1782 = vmatprep.subr.bf16.mxu0 0
    %1783 = vmatpush1.bf16.msra.mxu0 0
    %1784 = vmatprep.subr.bf16.mxu0 0
    %1785 = vmatpush1.bf16.msra.mxu0 0
    %1786 = vmatprep.subr.bf16.mxu0 0
    %1787 = vmatpush1.bf16.msra.mxu0 0
    %1788 = vmatprep.subr.bf16.mxu0 0
    %1789 = vmatpush1.bf16.msra.mxu0 0
    %1790 = vmatprep.subr.bf16.mxu0 0
    %1791 = vmatpush1.bf16.msra.mxu0 0
    %1792 = vmatprep.subr.bf16.mxu0 0
    %1793 = vmatpush1.bf16.msra.mxu0 0
    %1794 = vmatprep.subr.bf16.mxu0 0
    %1795 = vmatpush1.bf16.msra.mxu0 0
    %1796 = vmatprep.subr.bf16.mxu0 0
    %1797 = vmatpush1.bf16.msra.mxu0 0
    %1798 = vmatprep.mubr.bf16.mxu0 0
    %1799 = vmatmul.mubr.bf16.gmra.mrb[0].mxu0 %v1371
    %v1800 = vpop.f32.mrb[0].mxu0
    %v1801 = vadd.f32 0.0, %v1800
    %v1802 = vpop.f32.mrb[0].mxu0
    %v1803 = vpop.f32.mrb[0].mxu0
    %v1804 = vadd.f32 0.0, %v1803
    %v1805 = vpop.f32.mrb[0].mxu0
    %1806 = vmatprep.mubr.bf16.mxu0 0
    %1807 = vmatmul.mubr.bf16.gmra.mrb[0].mxu0 %v1374
    %v1808 = vpop.f32.mrb[0].mxu0
    %v1809 = vadd.f32 0.0, %v1808
    %v1810 = vpop.f32.mrb[0].mxu0
    %v1811 = vpop.f32.mrb[0].mxu0
    %v1812 = vadd.f32 0.0, %v1811
    %v1813 = vpop.f32.mrb[0].mxu0
    %1814 = vdwg.mxu0
    %v1815 = vadd.f32 %v1738, %v1801
    %v1816 = vadd.f32 %v1739, %v1804
    %v1817 = vadd.f32 %v1740, %v1809
    %v1818 = vadd.f32 %v1741, %v1812
    %v1819 = vld [vmem:[%s5] sm:$0x1]
    %v1821 = vlaneseq
    %v1822 = vshrl.u32 %v1821, 7
    %v1823 = vsub.s32 0, %v1822
    %v1824 = vrot.slane %v1819, %v1823
    %v1826 = vadd.f32 %v1815, %v1824
    %v1827 = vadd.f32 %v1816, %v1824
    %v1828 = vadd.f32 %v1817, %v1824
    %v1829 = vadd.f32 %v1818, %v1824
    %v1830 = vrot.slane %v576, 4
    %v1831 = vmax.f32 %v576, %v1830
    %v1832 = vrot.slane %v1831, 2
    %v1833 = vmax.f32 %v1831, %v1832
    %v1834 = vrot.slane %v1833, 1
    %v1835 = vmax.f32 %v1833, %v1834
    %v1836 = vrot.slane %v577, 4
    %v1837 = vmax.f32 %v577, %v1836
    %v1838 = vrot.slane %v1837, 2
    %v1839 = vmax.f32 %v1837, %v1838
    %v1840 = vrot.slane %v1839, 1
    %v1841 = vmax.f32 %v1839, %v1840
    %v1842 = vmax.f32 %v1439, %v1440
    %v1843 = vrot.slane %v1842, 4
    %v1844 = vmax.f32 %v1842, %v1843
    %v1845 = vrot.slane %v1844, 2
    %v1846 = vmax.f32 %v1844, %v1845
    %v1847 = vrot.slane %v1846, 1
    %v1848 = vmax.f32 %v1846, %v1847
    %v1849 = vmax.f32 %v1441, %v1442
    %v1850 = vrot.slane %v1849, 4
    %v1851 = vmax.f32 %v1849, %v1850
    %v1852 = vrot.slane %v1851, 2
    %v1853 = vmax.f32 %v1851, %v1852
    %v1854 = vrot.slane %v1853, 1
    %v1855 = vmax.f32 %v1853, %v1854
    %v1856 = vpack.c.bf16 %v1835, %v1835
    %v1857 = vpack.c.bf16 %v1841, %v1841
    %v1858 = vld [vmem:[#allocation8] sm:$0xf]
    %v1859 = vld [vmem:[#allocation8 + $0x4] sm:$0xf]
    %v1860 = vld [vmem:[#allocation8 + $0x8] sm:$0xf]
    %v1861 = vld [vmem:[#allocation8 + $0xc] sm:$0xf]
    %v1862 = vld [vmem:[#allocation8 + $0x10] sm:$0xf]
    %v1863 = vld [vmem:[#allocation8 + $0x14] sm:$0xf]
    %v1864 = vld [vmem:[#allocation8 + $0x18] sm:$0xf]
    %v1865 = vld [vmem:[#allocation8 + $0x1c] sm:$0xf]
    %v1866 = vld [vmem:[#allocation8 + $0x20] sm:$0xf]
    %v1867 = vld [vmem:[#allocation8 + $0x24] sm:$0xf]
    %v1868 = vld [vmem:[#allocation8 + $0x28] sm:$0xf]
    %v1869 = vld [vmem:[#allocation8 + $0x2c] sm:$0xf]
    %v1870 = vld [vmem:[#allocation8 + $0x30] sm:$0xf]
    %v1871 = vld [vmem:[#allocation8 + $0x34] sm:$0xf]
    %v1872 = vld [vmem:[#allocation8 + $0x38] sm:$0xf]
    %v1873 = vld [vmem:[#allocation8 + $0x3c] sm:$0xf]
    %v1874 = vld [vmem:[%s11] sm:$0x1]
    %v1876 = vlaneseq
    %v1877 = vshrl.u32 %v1876, 7
    %v1878 = vsub.s32 0, %v1877
    %v1879 = vrot.slane %v1874, %v1878
    %v1883 = vunpack.c.l.b16 %v1856
    %v1884 = vunpack.c.l.b16 %v1857
    %vm1885 = vcmask 1041409
    %v1886 = vsel %vm1885, %v1884, %v1883
    %v1887 = vpack.c.b16 %v1886, %v1886
    %v1905 = vunpack.c.l.b16 %v1858
    %v1906 = vunpack.c.l.b16 %v1859
    %v1907 = vunpack.c.l.b16 %v1860
    %v1908 = vunpack.c.l.b16 %v1861
    %v1909 = vunpack.c.l.b16 %v1862
    %v1910 = vunpack.c.l.b16 %v1863
    %v1911 = vunpack.c.l.b16 %v1864
    %v1912 = vunpack.c.l.b16 %v1865
    %v1913 = vunpack.c.l.b16 %v1866
    %v1914 = vunpack.c.l.b16 %v1867
    %v1915 = vunpack.c.l.b16 %v1868
    %v1916 = vunpack.c.l.b16 %v1869
    %v1917 = vunpack.c.l.b16 %v1870
    %v1918 = vunpack.c.l.b16 %v1871
    %v1919 = vunpack.c.l.b16 %v1872
    %v1920 = vunpack.c.l.b16 %v1873
    %v1921 = vpack.c.b16 %v1906, %v1905
    %v1922 = vpack.c.b16 %v1908, %v1907
    %v1923 = vpack.c.b16 %v1910, %v1909
    %v1924 = vpack.c.b16 %v1912, %v1911
    %v1925 = vpack.c.b16 %v1914, %v1913
    %v1926 = vpack.c.b16 %v1916, %v1915
    %v1927 = vpack.c.b16 %v1918, %v1917
    %v1928 = vpack.c.b16 %v1920, %v1919
    %1937 = vmatprep.subr.bf16.mxu0 0
    %1938 = vmatpush1.bf16.msra.mxu0 %v1921
    %1939 = vmatprep.subr.bf16.mxu0 0
    %1940 = vmatpush1.bf16.msra.mxu0 %v1922
    %1941 = vmatprep.subr.bf16.mxu0 0
    %1942 = vmatpush1.bf16.msra.mxu0 %v1923
    %1943 = vmatprep.subr.bf16.mxu0 0
    %1944 = vmatpush1.bf16.msra.mxu0 %v1924
    %1945 = vmatprep.subr.bf16.mxu0 0
    %1946 = vmatpush1.bf16.msra.mxu0 %v1925
    %1947 = vmatprep.subr.bf16.mxu0 0
    %1948 = vmatpush1.bf16.msra.mxu0 %v1926
    %1949 = vmatprep.subr.bf16.mxu0 0
    %1950 = vmatpush1.bf16.msra.mxu0 %v1927
    %1951 = vmatprep.subr.bf16.mxu0 0
    %1952 = vmatpush1.bf16.msra.mxu0 %v1928
    %1953 = vmatprep.subr.bf16.mxu0 0
    %1954 = vmatpush1.bf16.msra.mxu0 0
    %1955 = vmatprep.subr.bf16.mxu0 0
    %1956 = vmatpush1.bf16.msra.mxu0 0
    %1957 = vmatprep.subr.bf16.mxu0 0
    %1958 = vmatpush1.bf16.msra.mxu0 0
    %1959 = vmatprep.subr.bf16.mxu0 0
    %1960 = vmatpush1.bf16.msra.mxu0 0
    %1961 = vmatprep.subr.bf16.mxu0 0
    %1962 = vmatpush1.bf16.msra.mxu0 0
    %1963 = vmatprep.subr.bf16.mxu0 0
    %1964 = vmatpush1.bf16.msra.mxu0 0
    %1965 = vmatprep.subr.bf16.mxu0 0
    %1966 = vmatpush1.bf16.msra.mxu0 0
    %1967 = vmatprep.subr.bf16.mxu0 0
    %1968 = vmatpush1.bf16.msra.mxu0 0
    %1969 = vmatprep.mubr.bf16.mxu0 0
    %1970 = vmatmul.mubr.bf16.gmra.mrb[0].mxu0 %v1887
    %v1971 = vpop.f32.mrb[0].mxu0
    %v1972 = vadd.f32 %v1879, %v1971
    %v1973 = vpop.f32.mrb[0].mxu0
    %v1974 = vpop.f32.mrb[0].mxu0
    %v1975 = vpop.f32.mrb[0].mxu0
    %1976 = vdwg.mxu0
    %v1977 = vpack.c.bf16 %v1848, %v1848
    %v1978 = vpack.c.bf16 %v1855, %v1855
    %v1979 = vld [vmem:[#allocation10] sm:$0xf]
    %v1980 = vld [vmem:[#allocation10 + $0x4] sm:$0xf]
    %v1981 = vld [vmem:[#allocation10 + $0x8] sm:$0xf]
    %v1982 = vld [vmem:[#allocation10 + $0xc] sm:$0xf]
    %v1983 = vld [vmem:[#allocation10 + $0x10] sm:$0xf]
    %v1984 = vld [vmem:[#allocation10 + $0x14] sm:$0xf]
    %v1985 = vld [vmem:[#allocation10 + $0x18] sm:$0xf]
    %v1986 = vld [vmem:[#allocation10 + $0x1c] sm:$0xf]
    %v1987 = vld [vmem:[#allocation10 + $0x20] sm:$0xf]
    %v1988 = vld [vmem:[#allocation10 + $0x24] sm:$0xf]
    %v1989 = vld [vmem:[#allocation10 + $0x28] sm:$0xf]
    %v1990 = vld [vmem:[#allocation10 + $0x2c] sm:$0xf]
    %v1991 = vld [vmem:[#allocation10 + $0x30] sm:$0xf]
    %v1992 = vld [vmem:[#allocation10 + $0x34] sm:$0xf]
    %v1993 = vld [vmem:[#allocation10 + $0x38] sm:$0xf]
    %v1994 = vld [vmem:[#allocation10 + $0x3c] sm:$0xf]
    %v1995 = vld [vmem:[%s13] sm:$0x1]
    %v1997 = vlaneseq
    %v1998 = vshrl.u32 %v1997, 7
    %v1999 = vsub.s32 0, %v1998
    %v2000 = vrot.slane %v1995, %v1999
    %v2004 = vunpack.c.l.b16 %v1977
    %v2005 = vunpack.c.l.b16 %v1978
    %v2006 = vsel %vm1885, %v2005, %v2004
    %v2007 = vpack.c.b16 %v2006, %v2006
    %v2025 = vunpack.c.l.b16 %v1979
    %v2026 = vunpack.c.l.b16 %v1980
    %v2027 = vunpack.c.l.b16 %v1981
    %v2028 = vunpack.c.l.b16 %v1982
    %v2029 = vunpack.c.l.b16 %v1983
    %v2030 = vunpack.c.l.b16 %v1984
    %v2031 = vunpack.c.l.b16 %v1985
    %v2032 = vunpack.c.l.b16 %v1986
    %v2033 = vunpack.c.l.b16 %v1987
    %v2034 = vunpack.c.l.b16 %v1988
    %v2035 = vunpack.c.l.b16 %v1989
    %v2036 = vunpack.c.l.b16 %v1990
    %v2037 = vunpack.c.l.b16 %v1991
    %v2038 = vunpack.c.l.b16 %v1992
    %v2039 = vunpack.c.l.b16 %v1993
    %v2040 = vunpack.c.l.b16 %v1994
    %v2041 = vpack.c.b16 %v2026, %v2025
    %v2042 = vpack.c.b16 %v2028, %v2027
    %v2043 = vpack.c.b16 %v2030, %v2029
    %v2044 = vpack.c.b16 %v2032, %v2031
    %v2045 = vpack.c.b16 %v2034, %v2033
    %v2046 = vpack.c.b16 %v2036, %v2035
    %v2047 = vpack.c.b16 %v2038, %v2037
    %v2048 = vpack.c.b16 %v2040, %v2039
    %2057 = vmatprep.subr.bf16.mxu0 0
    %2058 = vmatpush1.bf16.msra.mxu0 %v2041
    %2059 = vmatprep.subr.bf16.mxu0 0
    %2060 = vmatpush1.bf16.msra.mxu0 %v2042
    %2061 = vmatprep.subr.bf16.mxu0 0
    %2062 = vmatpush1.bf16.msra.mxu0 %v2043
    %2063 = vmatprep.subr.bf16.mxu0 0
    %2064 = vmatpush1.bf16.msra.mxu0 %v2044
    %2065 = vmatprep.subr.bf16.mxu0 0
    %2066 = vmatpush1.bf16.msra.mxu0 %v2045
    %2067 = vmatprep.subr.bf16.mxu0 0
    %2068 = vmatpush1.bf16.msra.mxu0 %v2046
    %2069 = vmatprep.subr.bf16.mxu0 0
    %2070 = vmatpush1.bf16.msra.mxu0 %v2047
    %2071 = vmatprep.subr.bf16.mxu0 0
    %2072 = vmatpush1.bf16.msra.mxu0 %v2048
    %2073 = vmatprep.subr.bf16.mxu0 0
    %2074 = vmatpush1.bf16.msra.mxu0 0
    %2075 = vmatprep.subr.bf16.mxu0 0
    %2076 = vmatpush1.bf16.msra.mxu0 0
    %2077 = vmatprep.subr.bf16.mxu0 0
    %2078 = vmatpush1.bf16.msra.mxu0 0
    %2079 = vmatprep.subr.bf16.mxu0 0
    %2080 = vmatpush1.bf16.msra.mxu0 0
    %2081 = vmatprep.subr.bf16.mxu0 0
    %2082 = vmatpush1.bf16.msra.mxu0 0
    %2083 = vmatprep.subr.bf16.mxu0 0
    %2084 = vmatpush1.bf16.msra.mxu0 0
    %2085 = vmatprep.subr.bf16.mxu0 0
    %2086 = vmatpush1.bf16.msra.mxu0 0
    %2087 = vmatprep.subr.bf16.mxu0 0
    %2088 = vmatpush1.bf16.msra.mxu0 0
    %2089 = vmatprep.mubr.bf16.mxu0 0
    %2090 = vmatmul.mubr.bf16.gmra.mrb[0].mxu0 %v2007
    %v2091 = vpop.f32.mrb[0].mxu0
    %v2092 = vadd.f32 %v2000, %v2091
    %v2093 = vpop.f32.mrb[0].mxu0
    %v2094 = vpop.f32.mrb[0].mxu0
    %v2095 = vpop.f32.mrb[0].mxu0
    %2096 = vdwg.mxu0
    %v2097 = vtanh.pop %v1439
    %v2098 = vtanh.pop %v1440
    %v2099 = vtanh.pop %v1441
    %v2100 = vtanh.pop %v1442
    %v2103 = vunpack.c.l.s4 1966171168
    %v2104 = vunpack.c.0.s8 %v2103
    %v2105 = vlaneseq
    %v2106 = vshrl.u32 %v2105, 7
    %v2107 = vsub.s32 %v2104, %v2106
    %v2108 = vrot.slane %v1972, %v2107
    %v2109 = vcombine.high %v2108, %v2108
    %v2111 = vunpack.c.l.s4 1966171168
    %v2112 = vunpack.c.0.s8 %v2111
    %v2113 = vlaneseq
    %v2114 = vshrl.u32 %v2113, 7
    %v2115 = vsub.s32 %v2112, %v2114
    %v2116 = vrot.slane %v2108, %v2115
    %v2118 = vunpack.c.l.s4 1966171168
    %v2119 = vunpack.c.0.s8 %v2118
    %v2120 = vlaneseq
    %v2121 = vshrl.u32 %v2120, 7
    %v2122 = vsub.s32 %v2119, %v2121
    %v2123 = vrot.slane %v2109, %v2122
    %v2124 = vlaneseq
    %v2125 = vshrl.u32 %v2124, 7
    %v2126 = vsub.s32 0, %v2125
    %v2127 = vrot.slane %v2116, %v2126
    %v2128 = vlaneseq
    %v2129 = vshrl.u32 %v2128, 7
    %v2130 = vsub.s32 0, %v2129
    %v2131 = vrot.slane %v2123, %v2130
    %v2134 = vadd.f32 %v1826, %v2127
    %v2135 = vadd.f32 %v1827, %v2127
    %v2136 = vadd.f32 %v1828, %v2131
    %v2137 = vadd.f32 %v1829, %v2131
    %v2138 = vmax.f32 %v2134, 0.0
    %v2139 = vmax.f32 %v2135, 0.0
    %v2140 = vmax.f32 %v2136, 0.0
    %v2141 = vmax.f32 %v2137, 0.0
    %v2142 = vmul.f32 %v2097, %v2138
    %v2143 = vmul.f32 %v2098, %v2139
    %v2144 = vmul.f32 %v2099, %v2140
    %v2145 = vmul.f32 %v2100, %v2141
    %v2146 = vtanh.pop %v576
    %v2147 = vtanh.pop %v577
    %v2150 = vunpack.c.l.s4 1966171168
    %v2151 = vunpack.c.0.s8 %v2150
    %v2152 = vlaneseq
    %v2153 = vshrl.u32 %v2152, 7
    %v2154 = vsub.s32 %v2151, %v2153
    %v2155 = vrot.slane %v2092, %v2154
    %v2156 = vcombine.high %v2155, %v2155
    %v2158 = vunpack.c.l.s4 1966171168
    %v2159 = vunpack.c.0.s8 %v2158
    %v2160 = vlaneseq
    %v2161 = vshrl.u32 %v2160, 7
    %v2162 = vsub.s32 %v2159, %v2161
    %v2163 = vrot.slane %v2155, %v2162
    %v2165 = vunpack.c.l.s4 1966171168
    %v2166 = vunpack.c.0.s8 %v2165
    %v2167 = vlaneseq
    %v2168 = vshrl.u32 %v2167, 7
    %v2169 = vsub.s32 %v2166, %v2168
    %v2170 = vrot.slane %v2156, %v2169
    %v2171 = vlaneseq
    %v2172 = vshrl.u32 %v2171, 7
    %v2173 = vsub.s32 0, %v2172
    %v2174 = vrot.slane %v2163, %v2173
    %v2175 = vlaneseq
    %v2176 = vshrl.u32 %v2175, 7
    %v2177 = vsub.s32 0, %v2176
    %v2178 = vrot.slane %v2170, %v2177
    %v2181 = vadd.f32 %v880, %v2174
    %v2182 = vadd.f32 %v881, %v2178
    %v2183 = vmax.f32 %v2181, 0.0
    %v2184 = vmax.f32 %v2182, 0.0
    %v2185 = vmul.f32 %v2146, %v2183
    %v2186 = vmul.f32 %v2147, %v2184
    %v2187 = vmax.f32 %v2142, %v2143
    %v2188 = vrot.slane %v2187, 4
    %v2189 = vmax.f32 %v2187, %v2188
    %v2190 = vrot.slane %v2189, 2
    %v2191 = vmax.f32 %v2189, %v2190
    %v2192 = vrot.slane %v2191, 1
    %v2193 = vmax.f32 %v2191, %v2192
    %v2194 = vmax.f32 %v2144, %v2145
    %v2195 = vrot.slane %v2194, 4
    %v2196 = vmax.f32 %v2194, %v2195
    %v2197 = vrot.slane %v2196, 2
    %v2198 = vmax.f32 %v2196, %v2197
    %v2199 = vrot.slane %v2198, 1
    %v2200 = vmax.f32 %v2198, %v2199
    %v2201 = vrot.slane %v2185, 4
    %v2202 = vmax.f32 %v2185, %v2201
    %v2203 = vrot.slane %v2202, 2
    %v2204 = vmax.f32 %v2202, %v2203
    %v2205 = vrot.slane %v2204, 1
    %v2206 = vmax.f32 %v2204, %v2205
    %v2207 = vrot.slane %v2186, 4
    %v2208 = vmax.f32 %v2186, %v2207
    %v2209 = vrot.slane %v2208, 2
    %v2210 = vmax.f32 %v2208, %v2209
    %v2211 = vrot.slane %v2210, 1
    %v2212 = vmax.f32 %v2210, %v2211
    %v2213 = vpack.c.bf16 %v2193, %v2193
    %v2214 = vpack.c.bf16 %v2200, %v2200
    %v2215 = vld [vmem:[#allocation11] sm:$0xf]
    %v2216 = vld [vmem:[#allocation11 + $0x4] sm:$0xf]
    %v2217 = vld [vmem:[#allocation11 + $0x8] sm:$0xf]
    %v2218 = vld [vmem:[#allocation11 + $0xc] sm:$0xf]
    %v2219 = vld [vmem:[#allocation11 + $0x10] sm:$0xf]
    %v2220 = vld [vmem:[#allocation11 + $0x14] sm:$0xf]
    %v2221 = vld [vmem:[#allocation11 + $0x18] sm:$0xf]
    %v2222 = vld [vmem:[#allocation11 + $0x1c] sm:$0xf]
    %v2223 = vld [vmem:[#allocation11 + $0x20] sm:$0xf]
    %v2224 = vld [vmem:[#allocation11 + $0x24] sm:$0xf]
    %v2225 = vld [vmem:[#allocation11 + $0x28] sm:$0xf]
    %v2226 = vld [vmem:[#allocation11 + $0x2c] sm:$0xf]
    %v2227 = vld [vmem:[#allocation11 + $0x30] sm:$0xf]
    %v2228 = vld [vmem:[#allocation11 + $0x34] sm:$0xf]
    %v2229 = vld [vmem:[#allocation11 + $0x38] sm:$0xf]
    %v2230 = vld [vmem:[#allocation11 + $0x3c] sm:$0xf]
    %v2231 = vpack.c.bf16 %v2206, %v2206
    %v2232 = vpack.c.bf16 %v2212, %v2212
    %v2233 = vld [vmem:[#allocation13] sm:$0xf]
    %v2234 = vld [vmem:[#allocation13 + $0x4] sm:$0xf]
    %v2235 = vld [vmem:[#allocation13 + $0x8] sm:$0xf]
    %v2236 = vld [vmem:[#allocation13 + $0xc] sm:$0xf]
    %v2237 = vld [vmem:[#allocation13 + $0x10] sm:$0xf]
    %v2238 = vld [vmem:[#allocation13 + $0x14] sm:$0xf]
    %v2239 = vld [vmem:[#allocation13 + $0x18] sm:$0xf]
    %v2240 = vld [vmem:[#allocation13 + $0x1c] sm:$0xf]
    %v2241 = vld [vmem:[#allocation13 + $0x20] sm:$0xf]
    %v2242 = vld [vmem:[#allocation13 + $0x24] sm:$0xf]
    %v2243 = vld [vmem:[#allocation13 + $0x28] sm:$0xf]
    %v2244 = vld [vmem:[#allocation13 + $0x2c] sm:$0xf]
    %v2245 = vld [vmem:[#allocation13 + $0x30] sm:$0xf]
    %v2246 = vld [vmem:[#allocation13 + $0x34] sm:$0xf]
    %v2247 = vld [vmem:[#allocation13 + $0x38] sm:$0xf]
    %v2248 = vld [vmem:[#allocation13 + $0x3c] sm:$0xf]
    %v2251 = vunpack.c.l.b16 %v2231
    %v2252 = vunpack.c.l.b16 %v2232
    %v2253 = vsel %vm1885, %v2252, %v2251
    %v2254 = vpack.c.b16 %v2253, %v2253
    %v2272 = vunpack.c.l.b16 %v2233
    %v2273 = vunpack.c.l.b16 %v2234
    %v2274 = vunpack.c.l.b16 %v2235
    %v2275 = vunpack.c.l.b16 %v2236
    %v2276 = vunpack.c.l.b16 %v2237
    %v2277 = vunpack.c.l.b16 %v2238
    %v2278 = vunpack.c.l.b16 %v2239
    %v2279 = vunpack.c.l.b16 %v2240
    %v2280 = vunpack.c.l.b16 %v2241
    %v2281 = vunpack.c.l.b16 %v2242
    %v2282 = vunpack.c.l.b16 %v2243
    %v2283 = vunpack.c.l.b16 %v2244
    %v2284 = vunpack.c.l.b16 %v2245
    %v2285 = vunpack.c.l.b16 %v2246
    %v2286 = vunpack.c.l.b16 %v2247
    %v2287 = vunpack.c.l.b16 %v2248
    %v2288 = vpack.c.b16 %v2273, %v2272
    %v2289 = vpack.c.b16 %v2275, %v2274
    %v2290 = vpack.c.b16 %v2277, %v2276
    %v2291 = vpack.c.b16 %v2279, %v2278
    %v2292 = vpack.c.b16 %v2281, %v2280
    %v2293 = vpack.c.b16 %v2283, %v2282
    %v2294 = vpack.c.b16 %v2285, %v2284
    %v2295 = vpack.c.b16 %v2287, %v2286
    %2304 = vmatprep.subr.bf16.mxu0 0
    %2305 = vmatpush1.bf16.msra.mxu0 %v2288
    %2306 = vmatprep.subr.bf16.mxu0 0
    %2307 = vmatpush1.bf16.msra.mxu0 %v2289
    %2308 = vmatprep.subr.bf16.mxu0 0
    %2309 = vmatpush1.bf16.msra.mxu0 %v2290
    %2310 = vmatprep.subr.bf16.mxu0 0
    %2311 = vmatpush1.bf16.msra.mxu0 %v2291
    %2312 = vmatprep.subr.bf16.mxu0 0
    %2313 = vmatpush1.bf16.msra.mxu0 %v2292
    %2314 = vmatprep.subr.bf16.mxu0 0
    %2315 = vmatpush1.bf16.msra.mxu0 %v2293
    %2316 = vmatprep.subr.bf16.mxu0 0
    %2317 = vmatpush1.bf16.msra.mxu0 %v2294
    %2318 = vmatprep.subr.bf16.mxu0 0
    %2319 = vmatpush1.bf16.msra.mxu0 %v2295
    %2320 = vmatprep.subr.bf16.mxu0 0
    %2321 = vmatpush1.bf16.msra.mxu0 0
    %2322 = vmatprep.subr.bf16.mxu0 0
    %2323 = vmatpush1.bf16.msra.mxu0 0
    %2324 = vmatprep.subr.bf16.mxu0 0
    %2325 = vmatpush1.bf16.msra.mxu0 0
    %2326 = vmatprep.subr.bf16.mxu0 0
    %2327 = vmatpush1.bf16.msra.mxu0 0
    %2328 = vmatprep.subr.bf16.mxu0 0
    %2329 = vmatpush1.bf16.msra.mxu0 0
    %2330 = vmatprep.subr.bf16.mxu0 0
    %2331 = vmatpush1.bf16.msra.mxu0 0
    %2332 = vmatprep.subr.bf16.mxu0 0
    %2333 = vmatpush1.bf16.msra.mxu0 0
    %2334 = vmatprep.subr.bf16.mxu0 0
    %2335 = vmatpush1.bf16.msra.mxu0 0
    %2336 = vmatprep.mubr.bf16.mxu0 0
    %2337 = vmatmul.mubr.bf16.gmra.mrb[0].mxu0 %v2254
    %v2338 = vpop.f32.mrb[0].mxu0
    %v2339 = vadd.f32 0.0, %v2338
    %v2340 = vpop.f32.mrb[0].mxu0
    %v2341 = vpop.f32.mrb[0].mxu0
    %v2342 = vpop.f32.mrb[0].mxu0
    %2343 = vdwg.mxu0
    %v2346 = vunpack.c.l.b16 %v2213
    %v2347 = vunpack.c.l.b16 %v2214
    %v2348 = vsel %vm1885, %v2347, %v2346
    %v2349 = vpack.c.b16 %v2348, %v2348
    %v2367 = vunpack.c.l.b16 %v2215
    %v2368 = vunpack.c.l.b16 %v2216
    %v2369 = vunpack.c.l.b16 %v2217
    %v2370 = vunpack.c.l.b16 %v2218
    %v2371 = vunpack.c.l.b16 %v2219
    %v2372 = vunpack.c.l.b16 %v2220
    %v2373 = vunpack.c.l.b16 %v2221
    %v2374 = vunpack.c.l.b16 %v2222
    %v2375 = vunpack.c.l.b16 %v2223
    %v2376 = vunpack.c.l.b16 %v2224
    %v2377 = vunpack.c.l.b16 %v2225
    %v2378 = vunpack.c.l.b16 %v2226
    %v2379 = vunpack.c.l.b16 %v2227
    %v2380 = vunpack.c.l.b16 %v2228
    %v2381 = vunpack.c.l.b16 %v2229
    %v2382 = vunpack.c.l.b16 %v2230
    %v2383 = vpack.c.b16 %v2368, %v2367
    %v2384 = vpack.c.b16 %v2370, %v2369
    %v2385 = vpack.c.b16 %v2372, %v2371
    %v2386 = vpack.c.b16 %v2374, %v2373
    %v2387 = vpack.c.b16 %v2376, %v2375
    %v2388 = vpack.c.b16 %v2378, %v2377
    %v2389 = vpack.c.b16 %v2380, %v2379
    %v2390 = vpack.c.b16 %v2382, %v2381
    %2399 = vmatprep.subr.bf16.mxu0 0
    %2400 = vmatpush1.bf16.msra.mxu0 %v2383
    %2401 = vmatprep.subr.bf16.mxu0 0
    %2402 = vmatpush1.bf16.msra.mxu0 %v2384
    %2403 = vmatprep.subr.bf16.mxu0 0
    %2404 = vmatpush1.bf16.msra.mxu0 %v2385
    %2405 = vmatprep.subr.bf16.mxu0 0
    %2406 = vmatpush1.bf16.msra.mxu0 %v2386
    %2407 = vmatprep.subr.bf16.mxu0 0
    %2408 = vmatpush1.bf16.msra.mxu0 %v2387
    %2409 = vmatprep.subr.bf16.mxu0 0
    %2410 = vmatpush1.bf16.msra.mxu0 %v2388
    %2411 = vmatprep.subr.bf16.mxu0 0
    %2412 = vmatpush1.bf16.msra.mxu0 %v2389
    %2413 = vmatprep.subr.bf16.mxu0 0
    %2414 = vmatpush1.bf16.msra.mxu0 %v2390
    %2415 = vmatprep.subr.bf16.mxu0 0
    %2416 = vmatpush1.bf16.msra.mxu0 0
    %2417 = vmatprep.subr.bf16.mxu0 0
    %2418 = vmatpush1.bf16.msra.mxu0 0
    %2419 = vmatprep.subr.bf16.mxu0 0
    %2420 = vmatpush1.bf16.msra.mxu0 0
    %2421 = vmatprep.subr.bf16.mxu0 0
    %2422 = vmatpush1.bf16.msra.mxu0 0
    %2423 = vmatprep.subr.bf16.mxu0 0
    %2424 = vmatpush1.bf16.msra.mxu0 0
    %2425 = vmatprep.subr.bf16.mxu0 0
    %2426 = vmatpush1.bf16.msra.mxu0 0
    %2427 = vmatprep.subr.bf16.mxu0 0
    %2428 = vmatpush1.bf16.msra.mxu0 0
    %2429 = vmatprep.subr.bf16.mxu0 0
    %2430 = vmatpush1.bf16.msra.mxu0 0
    %2431 = vmatprep.mubr.bf16.mxu0 0
    %2432 = vmatmul.mubr.bf16.gmra.mrb[0].mxu0 %v2349
    %v2433 = vpop.f32.mrb[0].mxu0
    %v2434 = vadd.f32 %v2339, %v2433
    %v2435 = vpop.f32.mrb[0].mxu0
    %v2436 = vpop.f32.mrb[0].mxu0
    %v2437 = vpop.f32.mrb[0].mxu0
    %2438 = vdwg.mxu0
    %v2439 = vld [vmem:[%s16] sm:$0x1]
    %v2441 = vlaneseq
    %v2442 = vshrl.u32 %v2441, 7
    %v2443 = vsub.s32 0, %v2442
    %v2444 = vrot.slane %v2439, %v2443
    %v2446 = vadd.f32 %v2434, %v2444
    %2447 = vst [vmem:[#allocation14] sm:$0x3] %v2446
    // Predicated region
    $region98: #{tpu_custom_call.1} parent=1 // pred_check
      _
    $region99: #{tpu_custom_call.1} parent=1 // pred_check_branch
      %2449 = sbr.rel (0) target = $region101
    $region100: #{tpu_custom_call.1} parent=1 // pred_region
      %s2451 = ssub.s32 32, 32
      %2452 = vsyncadd [#allocation4], %s2451
      %s2454 = sshll.u32 [#allocation14], 4
      %s2455 = int_to_ptr.vmem [resolvable:$true] %s2454
      %2457 = dma.vmem_to_hbm [thread:$0]  %s2455, 32, %s17, [#allocation4]
    $region101: #{tpu_custom_call.1} parent=1 // pred_fallthru
      _
    // Predicated region
    $region102: #{tpu_custom_call.1} parent=1 // pred_check
      _
    $region103: #{tpu_custom_call.1} parent=1 // pred_check_branch
      %2459 = sbr.rel (0) target = $region105
    $region104: #{tpu_custom_call.1} parent=1 // pred_region
      %2460 = dma.done [#allocation4], 32
    $region105: #{tpu_custom_call.1} parent=1 // pred_fallthru
      _
    %2461 = vsyncpa [#allocation3], 1
    %2462 = vsyncpa [#allocation6], 1
    %2463 = vsyncpa [#allocation9], 1
    %2464 = vsyncpa [#allocation12], 1
    %2465 = vsyncpa [#allocation4], 1

</llo_original>
